<compile_context>
chip_gen: v7x
topology: tpu7x:2x2x1
jax: 0.10.0
libtpu: 0.0.40
codegen_flags: <defaults>
</compile_context>

<pallas_src>
import functools
import math

import jax
import jax.numpy as jnp
from jax import lax
from jax.experimental import pallas as pl
from jax.experimental.pallas import tpu as pltpu

MIN_NORM = 1e-15          # PoincareBall.min_norm in HGCN
MIN_SQ = MIN_NORM * MIN_NORM
BALL_EPS = 4e-3           # PoincareBall.eps[torch.float32]


def _round_up(x, m):
    return (x + m - 1) // m * m


def _vmem_limit_bytes():
    """Generation-aware scoped-VMEM budget (3/4 of capacity, capped)."""
    cap = 64 * 1024 * 1024          # conservative fallback (v7x per-TC VMEM)
    try:
        info = pltpu.get_tpu_info()
        cap = int(getattr(info, "vmem_capacity_bytes", cap))
    except Exception:
        pass
    return min((cap * 3) // 4, 100 * 1024 * 1024)


def _tile_candidates(n_pad, max_tile, prefer_multi_step=True):
    """Multiples of 128 that divide n_pad, <= max_tile, descending.

    With prefer_multi_step, tiles leaving >= 2 grid steps come first so the
    'parallel' grid axis can shard across the 2 TensorCores on v7x.
    """
    cap = min(n_pad, max_tile)
    divs = [t for t in range(128, cap + 1, 128) if n_pad % t == 0] or [128]
    divs = sorted(divs, reverse=True)
    if not prefer_multi_step:
        return divs
    multi = [t for t in divs if n_pad // t >= 2]
    single = [t for t in divs if n_pad // t < 2]
    return multi + single


def _artanh(z):
    # HGCN clamps to 1 - 1e-15 (fp64); fp32-safe clamp used here.
    z = jnp.clip(z, -1.0 + 1e-7, 1.0 - 1e-7)
    return 0.5 * (jnp.log1p(z) - jnp.log1p(-z))


# ---------------------------------------------------------------------------
# Kernel A: per-node hyperbolic transform
#   x tile (tm, D_in_pad)  ->  support_tangent tile (tm, D_out_pad), bf16
# ---------------------------------------------------------------------------
def _make_transform_kernel(c: float):
    sqrt_c = math.sqrt(c)
    inv_sqrt_c = 1.0 / sqrt_c
    maxnorm = (1.0 - BALL_EPS) / sqrt_c
    inv_maxnorm = 1.0 / maxnorm

    def kernel(x_ref, w_ref, hb_ref, b2_ref, tan_ref):
        x = x_ref[...]                      # (tm, D_in_pad)  f32
        w = w_ref[...]                      # (D_in_pad, D_out_pad)  VMEM-resident
        hyp_bias = hb_ref[...]              # (1, D_out_pad)         VMEM-resident
        b2 = b2_ref[0, 0]                   # scalar |hyp_bias|^2    (SMEM)

        # --- mobius_matvec(drop_weight.T, x, c):  mx = x @ W  (MXU) ---
        x2s = jnp.sum(x * x, axis=-1, keepdims=True)
        inv_x_norm = lax.rsqrt(jnp.maximum(x2s, MIN_SQ))
        x_norm = x2s * inv_x_norm

        mx = jnp.dot(x, w, preferred_element_type=jnp.float32)
        mx2s = jnp.sum(mx * mx, axis=-1, keepdims=True)
        inv_mx_norm = lax.rsqrt(jnp.maximum(mx2s, MIN_SQ))

        ratio = mx2s * inv_mx_norm * inv_x_norm          # = mx_norm / x_norm
        scale = jnp.tanh(ratio * _artanh(sqrt_c * x_norm)) * (inv_mx_norm * inv_sqrt_c)
        # zero-row guard folded into the (tm, 1) scale vector (mx == 0 <=> mx2s == 0)
        scale = jnp.where(mx2s == 0.0, 0.0, scale)
        support = scale * mx

        # --- mobius_add(support, hyp_bias, c) (y2 = b2 precomputed in wrapper) ---
        x2 = (scale * scale) * mx2s                      # ||support||^2, no extra reduce
        xy = scale * jnp.sum(mx * hyp_bias, axis=-1, keepdims=True)
        num = (1.0 + 2.0 * c * xy + c * b2) * support + (1.0 - c * x2) * hyp_bias
        den = 1.0 + 2.0 * c * xy + (c * c) * b2 * x2
        m = num * (1.0 / jnp.maximum(den, MIN_NORM))     # exact reciprocal on (tm, 1)

        # --- proj + logmap0, sharing a single row-norm reduction ---
        m2s = jnp.sum(m * m, axis=-1, keepdims=True)
        inv_m_norm = lax.rsqrt(jnp.maximum(m2s, MIN_SQ))
        m_norm = m2s * inv_m_norm
        over = m_norm > maxnorm
        proj_scale = jnp.where(over, maxnorm * inv_m_norm, 1.0)
        p_norm = jnp.where(over, maxnorm, m_norm)
        inv_p_norm = jnp.where(over, inv_maxnorm, inv_m_norm)
        log_scale = _artanh(sqrt_c * p_norm) * (inv_p_norm * inv_sqrt_c)
        tan_ref[...] = (m * (proj_scale * log_scale)).astype(tan_ref.dtype)

    return kernel


# ---------------------------------------------------------------------------
# Kernel B (path 1): tangent VMEM-resident, full-K adjacency row panels
#   out = relu(adj_panel @ tangent), adjacency/tangent bf16, f32 accumulation.
# ---------------------------------------------------------------------------
def _aggregate_resident_kernel(adj_ref, tan_ref, out_ref):
    out_ref[...] = jnp.maximum(
        jnp.dot(adj_ref[...], tan_ref[...], preferred_element_type=jnp.float32),
        0.0)


# ---------------------------------------------------------------------------
# Kernel B (path 2, large-N fallback): (N/tm, N/tk) grid, f32 VMEM accumulator
# ---------------------------------------------------------------------------
def _aggregate_streamed_kernel(adj_ref, tan_ref, out_ref, acc_ref):
    @pl.when(pl.program_id(1) == 0)
    def _():
        acc_ref[...] = jnp.zeros_like(acc_ref)

    acc_ref[...] += jnp.dot(adj_ref[...], tan_ref[...],
                            preferred_element_type=jnp.float32)

    @pl.when(pl.program_id(1) == pl.num_programs(1) - 1)
    def _():
        out_ref[...] = jnp.maximum(acc_ref[...], 0.0)


# ---------------------------------------------------------------------------
# Wrapper
# ---------------------------------------------------------------------------
@functools.partial(jax.jit, static_argnames=("c",))
def graph_convolution(adjacency, x, weight, bias, *, c=1.0):
    """HGCN GraphConvolution forward (use_att=False, use_bias=True, dropout=0).

    adjacency: (N, N) dense normalized adjacency
    x:         (N, D_in) hyperbolic node features
    weight:    (D_in, D_out)
    bias:      (D_out,) or (1, D_out)
    """
    n, d_in = x.shape
    d_out = weight.shape[1]
    c = float(c)
    sqrt_c = math.sqrt(c)

    n_pad = _round_up(n, 128)
    d_in_pad = _round_up(d_in, 128)
    d_out_pad = _round_up(d_out, 128)

    vmem_limit = _vmem_limit_bytes()
    budget = max(vmem_limit - 8 * 1024 * 1024, vmem_limit // 2)

    # ---- single-pass pad (+ bf16 cast for adjacency); skipped when aligned ----
    x_f32 = x.astype(jnp.float32)
    if (n_pad, d_in_pad) != (n, d_in):
        x_p = jnp.zeros((n_pad, d_in_pad), jnp.float32).at[:n, :d_in].set(x_f32)
    else:
        x_p = x_f32

    adj_bf = adjacency.astype(jnp.bfloat16)
    if n_pad != n:
        adj_p = jnp.zeros((n_pad, n_pad), jnp.bfloat16).at[:n, :n].set(adj_bf)
    else:
        adj_p = adj_bf

    w_f32 = weight.astype(jnp.float32)
    if (d_in_pad, d_out_pad) != (d_in, d_out):
        w_p = jnp.zeros((d_in_pad, d_out_pad), jnp.float32).at[:d_in, :d_out].set(w_f32)
    else:
        w_p = w_f32

    b_p = jnp.zeros((1, d_out_pad), jnp.float32).at[:, :d_out].set(
        bias.reshape(1, -1).astype(jnp.float32))

    # ---- hoisted constant bias path: hyp_bias = proj(expmap0(proj_tan0(bias))) ----
    maxnorm = (1.0 - BALL_EPS) / sqrt_c
    b_norm = jnp.maximum(jnp.linalg.norm(b_p, axis=-1, keepdims=True), MIN_NORM)
    hyp_bias = jnp.tanh(sqrt_c * b_norm) * b_p / (sqrt_c * b_norm)
    hb_norm = jnp.maximum(jnp.linalg.norm(hyp_bias, axis=-1, keepdims=True), MIN_NORM)
    hyp_bias = jnp.where(hb_norm > maxnorm, hyp_bias / hb_norm * maxnorm, hyp_bias)
    b2 = jnp.sum(hyp_bias * hyp_bias).reshape(1, 1)          # scalar |hyp_bias|^2

    # ---- kernel A: per-node hyperbolic transform (gridded over row tiles) ----
    tm_a = _tile_candidates(n_pad, 512)[0]
    tangent = pl.pallas_call(
        _make_transform_kernel(c),
        out_shape=jax.ShapeDtypeStruct((n_pad, d_out_pad), jnp.bfloat16),
        grid_spec=pltpu.PrefetchScalarGridSpec(
            num_scalar_prefetch=0,
            grid=(n_pad // tm_a,),
            in_specs=[
                pl.BlockSpec((tm_a, d_in_pad), lambda i: (i, 0)),        # x tile
                pl.BlockSpec((d_in_pad, d_out_pad), lambda i: (0, 0)),   # weight (resident)
                pl.BlockSpec((1, d_out_pad), lambda i: (0, 0)),          # hyp_bias (resident)
                pl.BlockSpec(memory_space=pltpu.MemorySpace.SMEM),       # |hyp_bias|^2 scalar
            ],
            out_specs=pl.BlockSpec((tm_a, d_out_pad), lambda i: (i, 0)),
        ),
        compiler_params=pltpu.CompilerParams(
            dimension_semantics=("parallel",),
            vmem_limit_bytes=vmem_limit),
    )(x_p, w_p, hyp_bias, b2)

    # ---- kernel B: out = relu(adj @ tangent) ----
    tm_b = None
    for t in _tile_candidates(n_pad, 1024):
        need = (n_pad * d_out_pad * 2          # resident bf16 tangent (single buffer)
                + 2 * t * n_pad * 2            # double-buffered bf16 adjacency row panel
                + 2 * t * d_out_pad * 4)       # double-buffered f32 output tile
        if need <= budget:
            tm_b = t
            break

    if tm_b is not None:
        # Path 1: tangent VMEM-resident; adjacency and tangent each read exactly once.
        out_p = pl.pallas_call(
            _aggregate_resident_kernel,
            out_shape=jax.ShapeDtypeStruct((n_pad, d_out_pad), jnp.float32),
            grid_spec=pltpu.PrefetchScalarGridSpec(
                num_scalar_prefetch=0,
                grid=(n_pad // tm_b,),
                in_specs=[
                    pl.BlockSpec((tm_b, n_pad), lambda i: (i, 0)),        # adj row panel
                    pl.BlockSpec((n_pad, d_out_pad), lambda i: (0, 0)),   # tangent (resident)
                ],
                out_specs=pl.BlockSpec((tm_b, d_out_pad), lambda i: (i, 0)),
            ),
            compiler_params=pltpu.CompilerParams(
                dimension_semantics=("parallel",),
                vmem_limit_bytes=vmem_limit),
        )(adj_p, tangent)
    else:
        # Path 2: streamed (i, k) grid with f32 accumulator (very large N).
        tm_s = _tile_candidates(n_pad, 512)[0]
        tk_s = _tile_candidates(n_pad, 2048, prefer_multi_step=False)[0]
        out_p = pl.pallas_call(
            _aggregate_streamed_kernel,
            out_shape=jax.ShapeDtypeStruct((n_pad, d_out_pad), jnp.float32),
            grid_spec=pltpu.PrefetchScalarGridSpec(
                num_scalar_prefetch=0,
                grid=(n_pad // tm_s, n_pad // tk_s),
                in_specs=[
                    pl.BlockSpec((tm_s, tk_s), lambda i, k: (i, k)),          # adjacency tile
                    pl.BlockSpec((tk_s, d_out_pad), lambda i, k: (k, 0)),     # tangent tile
                ],
                out_specs=pl.BlockSpec((tm_s, d_out_pad), lambda i, k: (i, 0)),
                scratch_shapes=[pltpu.VMEM((tm_s, d_out_pad), jnp.float32)],
            ),
            compiler_params=pltpu.CompilerParams(
                dimension_semantics=("parallel", "arbitrary"),
                vmem_limit_bytes=vmem_limit),
        )(adj_p, tangent)

    return out_p[:n, :d_out]


# ---------------------------------------------------------------------------
# Plain-jnp reference of the same math (sanity check)
# ---------------------------------------------------------------------------
def _reference(adjacency, x, weight, bias, c):
    sqrt_c = math.sqrt(c)

    def l2norm(v):
        return jnp.maximum(jnp.linalg.norm(v, axis=-1, keepdims=True), MIN_NORM)

    def proj(p):
        norm = l2norm(p)
        maxnorm = (1.0 - BALL_EPS) / sqrt_c
        return jnp.where(norm > maxnorm, p / norm * maxnorm, p)

    x_norm = l2norm(x)
    mx = x @ weight
    mx_norm = l2norm(mx)
    support = jnp.tanh(mx_norm / x_norm * _artanh(sqrt_c * x_norm)) * mx / (mx_norm * sqrt_c)
    support = jnp.where(jnp.all(mx == 0.0, -1, keepdims=True), 0.0, support)

    bias = bias.reshape(1, -1)
    b_norm = l2norm(bias)
    hyp_bias = proj(jnp.tanh(sqrt_c * b_norm) * bias / (sqrt_c * b_norm))

    x2 = jnp.sum(support * support, -1, keepdims=True)
    y2 = jnp.sum(hyp_bias * hyp_bias, -1, keepdims=True)
    xy = jnp.sum(support * hyp_bias, -1, keepdims=True)
    num = (1 + 2 * c * xy + c * y2) * support + (1 - c * x2) * hyp_bias
    den = 1 + 2 * c * xy + c * c * x2 * y2
    support = proj(num / jnp.maximum(den, MIN_NORM))

    p_norm = l2norm(support)
    tangent = _artanh(sqrt_c * p_norm) / (p_norm * sqrt_c) * support
    return jnp.maximum(adjacency @ tangent, 0.0)


if __name__ == "__main__":
    # Small shapes consistent with GraphConvolution(input_dim, output_dim, ...).
    # N=300 -> n_pad=384 exercises row padding (but no lcm over-padding now);
    # feature dims pad 48 -> 128 and 32 -> 128.
    N, D_IN, D_OUT = 300, 48, 32
    C = 1.0

    key = jax.random.PRNGKey(0)
    k_adj, k_x, k_w, k_b = jax.random.split(key, 4)

    # Adjacency: row-normalized dense random graph (stand-in for D^-1/2 (A+I) D^-1/2).
    adj_raw = (jax.random.uniform(k_adj, (N, N)) > 0.5).astype(jnp.float32)
    adj_raw = adj_raw + jnp.eye(N, dtype=jnp.float32)
    adjacency = adj_raw / jnp.sum(adj_raw, axis=-1, keepdims=True)

    # Input features well inside the Poincare ball; one exactly-zero row to
    # exercise the zero-row guard of mobius_matvec.
    x = 0.05 * jax.random.normal(k_x, (N, D_IN), dtype=jnp.float32)
    x = x.at[5].set(0.0)

    # Parameters: kaiming_uniform_-style weight; bias zero-init (reset_parameters),
    # plus a second check with a nonzero bias to exercise the mobius_add path.
    bound = math.sqrt(6.0 / D_OUT)
    weight = jax.random.uniform(k_w, (D_IN, D_OUT), minval=-bound, maxval=bound,
                                dtype=jnp.float32)
    bias_zero = jnp.zeros((1, D_OUT), dtype=jnp.float32)
    bias_rand = 0.02 * jax.random.normal(k_b, (1, D_OUT), dtype=jnp.float32)

    for bias in (bias_zero, bias_rand):
        out = graph_convolution(adjacency, x, weight, bias, c=C)
        out = jax.block_until_ready(out)
        ref = _reference(adjacency, x, weight, bias, C)
        assert out.shape == (N, D_OUT)
        # Tolerance covers the bf16 adjacency/tangent streams (f32 accumulation);
        # structural (tiling / padding / accumulation) bugs produce errors orders
        # of magnitude larger than this.
        assert jnp.allclose(out, ref, atol=3e-3, rtol=3e-2), (
            f"mismatch vs reference: max abs err "
            f"{float(jnp.max(jnp.abs(out - ref)))}")

    print("KERNEL_OK")
</pallas_src>

<mosaic_0001>
module attributes {stable_mosaic.version = 11 : i64} {
  func.func @_aggregate_resident_kernel(%arg0: i32, %arg1: memref<128x384xbf16, #tpu.memory_space<vmem>>, %arg2: memref<384x128xbf16, #tpu.memory_space<vmem>>, %arg3: memref<128x128xf32, #tpu.memory_space<vmem>>) attributes {dimension_semantics = [#tpu.dimension_semantics<parallel>], iteration_bounds = array<i64: 3>, scalar_prefetch = 0 : i64, scratch_operands = 0 : i64, tpu.core_type = #tpu.core_type<tc>, window_params = [{transform_indices = @transform_0, window_bounds = array<i64: 128, 384>}, {pipeline_mode = #tpu.pipeline_mode<synchronous>, transform_indices = @transform_1, window_bounds = array<i64: 384, 128>}, {transform_indices = @transform_2, window_bounds = array<i64: 128, 128>}]} {
    %c0 = arith.constant 0 : index
    %c0_0 = arith.constant 0 : index
    %0 = vector.load %arg1[%c0, %c0_0] : memref<128x384xbf16, #tpu.memory_space<vmem>>, vector<128x384xbf16>
    %c0_1 = arith.constant 0 : index
    %c0_2 = arith.constant 0 : index
    %1 = vector.load %arg2[%c0_1, %c0_2] : memref<384x128xbf16, #tpu.memory_space<vmem>>, vector<384x128xbf16>
    %cst = arith.constant dense<0.000000e+00> : vector<128x128xf32>
    %2 = tpu.matmul %0, %1, %cst {dimension_numbers = #tpu.dot_dimension_numbers<[1], [0], [0], [1], [0, 0, 1, 1], [], []>} : vector<128x384xbf16>, vector<384x128xbf16>, vector<128x128xf32> -> vector<128x128xf32>
    %cst_3 = arith.constant 0.000000e+00 : f32
    %3 = vector.broadcast %cst_3 : f32 to vector<128x128xf32>
    %4 = arith.maximumf %2, %3 : vector<128x128xf32>
    %c0_4 = arith.constant 0 : index
    %c0_5 = arith.constant 0 : index
    %5 = vector.load %arg3[%c0_4, %c0_5] : memref<128x128xf32, #tpu.memory_space<vmem>>, vector<128x128xf32>
    tpu.vector_store %arg3[%c0_4, %c0_5], %4 {strides = array<i32>} : memref<128x128xf32, #tpu.memory_space<vmem>>, vector<128x128xf32>,
    return
  }
  func.func @transform_0(%arg0: i32) -> (i32, i32) {
    %c0_i32 = arith.constant 0 : i32
    %c0_i32_0 = arith.constant 0 : i32
    return %arg0, %c0_i32 : i32, i32
  }
  func.func @transform_1(%arg0: i32) -> (i32, i32) {
    %c0_i32 = arith.constant 0 : i32
    %c0_i32_0 = arith.constant 0 : i32
    %c0_i32_1 = arith.constant 0 : i32
    return %c0_i32, %c0_i32_0 : i32, i32
  }
  func.func @transform_2(%arg0: i32) -> (i32, i32) {
    %c0_i32 = arith.constant 0 : i32
    %c0_i32_0 = arith.constant 0 : i32
    return %arg0, %c0_i32 : i32, i32
  }
}

module attributes {stable_mosaic.version = 11 : i64} {
  func.func @kernel(%arg0: i32, %arg1: memref<128x128xf32, #tpu.memory_space<vmem>>, %arg2: memref<128x128xf32, #tpu.memory_space<vmem>>, %arg3: memref<1x128xf32, #tpu.memory_space<vmem>>, %arg4: memref<1x1xf32, #tpu.memory_space<smem>>, %arg5: memref<128x128xbf16, #tpu.memory_space<vmem>>) attributes {dimension_semantics = [#tpu.dimension_semantics<parallel>], iteration_bounds = array<i64: 3>, scalar_prefetch = 0 : i64, scratch_operands = 0 : i64, tpu.core_type = #tpu.core_type<tc>, window_params = [{transform_indices = @transform_0, window_bounds = array<i64: 128, 128>}, {pipeline_mode = #tpu.pipeline_mode<synchronous>, transform_indices = @transform_1, window_bounds = array<i64: 128, 128>}, {pipeline_mode = #tpu.pipeline_mode<synchronous>, transform_indices = @transform_2, window_bounds = array<i64: 1, 128>}, {transform_indices = @transform_3, window_bounds = array<i64: 1, 1>}, {transform_indices = @transform_4, window_bounds = array<i64: 128, 128>}]} {
    %c0 = arith.constant 0 : index
    %c0_0 = arith.constant 0 : index
    %0 = vector.load %arg1[%c0, %c0_0] : memref<128x128xf32, #tpu.memory_space<vmem>>, vector<128x128xf32>
    %c0_1 = arith.constant 0 : index
    %c0_2 = arith.constant 0 : index
    %1 = vector.load %arg2[%c0_1, %c0_2] : memref<128x128xf32, #tpu.memory_space<vmem>>, vector<128x128xf32>
    %c0_3 = arith.constant 0 : index
    %c0_4 = arith.constant 0 : index
    %2 = vector.load %arg3[%c0_3, %c0_4] : memref<1x128xf32, #tpu.memory_space<vmem>>, vector<1x128xf32>
    %c0_5 = arith.constant 0 : index
    %c0_6 = arith.constant 0 : index
    %3 = memref.load %arg4[%c0_5, %c0_6] : memref<1x1xf32, #tpu.memory_space<smem>>
    %4 = arith.mulf %0, %0 : vector<128x128xf32>
    %cst = arith.constant dense<0.000000e+00> : vector<128xf32>
    %5 = vector.multi_reduction <add>, %4, %cst [1] : vector<128x128xf32> to vector<128xf32>
    %6 = vector.shape_cast %5 : vector<128xf32> to vector<128x1xf32>
    %cst_7 = arith.constant 1.000000e-30 : f32
    %7 = vector.broadcast %cst_7 : f32 to vector<128x1xf32>
    %8 = arith.maximumf %6, %7 : vector<128x1xf32>
    %9 = math.rsqrt %8 : vector<128x1xf32>
    %10 = arith.mulf %6, %9 : vector<128x1xf32>
    %cst_8 = arith.constant dense<0.000000e+00> : vector<128x128xf32>
    %11 = tpu.matmul %0, %1, %cst_8 {dimension_numbers = #tpu.dot_dimension_numbers<[1], [0], [0], [1], [0, 0, 1, 1], [], []>} : vector<128x128xf32>, vector<128x128xf32>, vector<128x128xf32> -> vector<128x128xf32>
    %12 = arith.mulf %11, %11 : vector<128x128xf32>
    %cst_9 = arith.constant dense<0.000000e+00> : vector<128xf32>
    %13 = vector.multi_reduction <add>, %12, %cst_9 [1] : vector<128x128xf32> to vector<128xf32>
    %14 = vector.shape_cast %13 : vector<128xf32> to vector<128x1xf32>
    %cst_10 = arith.constant 1.000000e-30 : f32
    %15 = vector.broadcast %cst_10 : f32 to vector<128x1xf32>
    %16 = arith.maximumf %14, %15 : vector<128x1xf32>
    %17 = math.rsqrt %16 : vector<128x1xf32>
    %18 = arith.mulf %14, %17 : vector<128x1xf32>
    %19 = arith.mulf %18, %9 : vector<128x1xf32>
    %cst_11 = arith.constant 1.000000e+00 : f32
    %20 = vector.broadcast %cst_11 : f32 to vector<128x1xf32>
    %21 = arith.mulf %20, %10 : vector<128x1xf32>
    %cst_12 = arith.constant -0.99999988 : f32
    %cst_13 = arith.constant 0.99999988 : f32
    %22 = vector.broadcast %cst_12 : f32 to vector<128x1xf32>
    %23 = arith.maximumf %22, %21 : vector<128x1xf32>
    %24 = vector.broadcast %cst_13 : f32 to vector<128x1xf32>
    %25 = arith.minimumf %24, %23 : vector<128x1xf32>
    %26 = math.log1p %25 : vector<128x1xf32>
    %cst_14 = arith.constant 0.000000e+00 : f32
    %27 = vector.broadcast %cst_14 : f32 to vector<128x1xf32>
    %28 = arith.subf %27, %25 : vector<128x1xf32>
    %29 = math.log1p %28 : vector<128x1xf32>
    %30 = arith.subf %26, %29 : vector<128x1xf32>
    %cst_15 = arith.constant 5.000000e-01 : f32
    %31 = vector.broadcast %cst_15 : f32 to vector<128x1xf32>
    %32 = arith.mulf %31, %30 : vector<128x1xf32>
    %33 = arith.mulf %19, %32 : vector<128x1xf32>
    %34 = math.tanh %33 : vector<128x1xf32>
    %cst_16 = arith.constant 1.000000e+00 : f32
    %35 = vector.broadcast %cst_16 : f32 to vector<128x1xf32>
    %36 = arith.mulf %17, %35 : vector<128x1xf32>
    %37 = arith.mulf %34, %36 : vector<128x1xf32>
    %cst_17 = arith.constant 0.000000e+00 : f32
    %38 = vector.broadcast %cst_17 : f32 to vector<128x1xf32>
    %39 = arith.cmpf oeq, %14, %38 : vector<128x1xf32>
    %cst_18 = arith.constant 0.000000e+00 : f32
    %40 = vector.broadcast %cst_18 : f32 to vector<128x1xf32>
    %41 = arith.select %39, %40, %37 : vector<128x1xi1>, vector<128x1xf32>
    %42 = vector.broadcast %41 : vector<128x1xf32> to vector<128x128xf32>
    %43 = arith.mulf %42, %11 : vector<128x128xf32>
    %44 = arith.mulf %41, %41 : vector<128x1xf32>
    %45 = arith.mulf %44, %14 : vector<128x1xf32>
    %46 = vector.broadcast %2 : vector<1x128xf32> to vector<128x128xf32>
    %47 = arith.mulf %11, %46 : vector<128x128xf32>
    %cst_19 = arith.constant dense<0.000000e+00> : vector<128xf32>
    %48 = vector.multi_reduction <add>, %47, %cst_19 [1] : vector<128x128xf32> to vector<128xf32>
    %49 = vector.shape_cast %48 : vector<128xf32> to vector<128x1xf32>
    %50 = arith.mulf %41, %49 : vector<128x1xf32>
    %cst_20 = arith.constant 2.000000e+00 : f32
    %51 = vector.broadcast %cst_20 : f32 to vector<128x1xf32>
    %52 = arith.mulf %51, %50 : vector<128x1xf32>
    %cst_21 = arith.constant 1.000000e+00 : f32
    %53 = vector.broadcast %cst_21 : f32 to vector<128x1xf32>
    %54 = arith.addf %53, %52 : vector<128x1xf32>
    %cst_22 = arith.constant 1.000000e+00 : f32
    %55 = arith.mulf %cst_22, %3 : f32
    %56 = vector.broadcast %55 : f32 to vector<128x1xf32>
    %57 = arith.addf %54, %56 : vector<128x1xf32>
    %58 = vector.broadcast %57 : vector<128x1xf32> to vector<128x128xf32>
    %59 = arith.mulf %58, %43 : vector<128x128xf32>
    %cst_23 = arith.constant 1.000000e+00 : f32
    %60 = vector.broadcast %cst_23 : f32 to vector<128x1xf32>
    %61 = arith.mulf %60, %45 : vector<128x1xf32>
    %cst_24 = arith.constant 1.000000e+00 : f32
    %62 = vector.broadcast %cst_24 : f32 to vector<128x1xf32>
    %63 = arith.subf %62, %61 : vector<128x1xf32>
    %64 = vector.broadcast %63 : vector<128x1xf32> to vector<128x128xf32>
    %65 = vector.broadcast %2 : vector<1x128xf32> to vector<128x128xf32>
    %66 = arith.mulf %64, %65 : vector<128x128xf32>
    %67 = arith.addf %59, %66 : vector<128x128xf32>
    %cst_25 = arith.constant 2.000000e+00 : f32
    %68 = vector.broadcast %cst_25 : f32 to vector<128x1xf32>
    %69 = arith.mulf %68, %50 : vector<128x1xf32>
    %cst_26 = arith.constant 1.000000e+00 : f32
    %70 = vector.broadcast %cst_26 : f32 to vector<128x1xf32>
    %71 = arith.addf %70, %69 : vector<128x1xf32>
    %cst_27 = arith.constant 1.000000e+00 : f32
    %72 = arith.mulf %cst_27, %3 : f32
    %73 = vector.broadcast %72 : f32 to vector<128x1xf32>
    %74 = arith.mulf %73, %45 : vector<128x1xf32>
    %75 = arith.addf %71, %74 : vector<128x1xf32>
    %cst_28 = arith.constant 1.000000e-15 : f32
    %76 = vector.broadcast %cst_28 : f32 to vector<128x1xf32>
    %77 = arith.maximumf %75, %76 : vector<128x1xf32>
    %cst_29 = arith.constant 1.000000e+00 : f32
    %78 = vector.broadcast %cst_29 : f32 to vector<128x1xf32>
    %79 = arith.divf %78, %77 : vector<128x1xf32>
    %80 = vector.broadcast %79 : vector<128x1xf32> to vector<128x128xf32>
    %81 = arith.mulf %67, %80 : vector<128x128xf32>
    %82 = arith.mulf %81, %81 : vector<128x128xf32>
    %cst_30 = arith.constant dense<0.000000e+00> : vector<128xf32>
    %83 = vector.multi_reduction <add>, %82, %cst_30 [1] : vector<128x128xf32> to vector<128xf32>
    %84 = vector.shape_cast %83 : vector<128xf32> to vector<128x1xf32>
    %cst_31 = arith.constant 1.000000e-30 : f32
    %85 = vector.broadcast %cst_31 : f32 to vector<128x1xf32>
    %86 = arith.maximumf %84, %85 : vector<128x1xf32>
    %87 = math.rsqrt %86 : vector<128x1xf32>
    %88 = arith.mulf %84, %87 : vector<128x1xf32>
    %cst_32 = arith.constant 0.995999991 : f32
    %89 = vector.broadcast %cst_32 : f32 to vector<128x1xf32>
    %90 = arith.cmpf ogt, %88, %89 : vector<128x1xf32>
    %cst_33 = arith.constant 0.995999991 : f32
    %91 = vector.broadcast %cst_33 : f32 to vector<128x1xf32>
    %92 = arith.mulf %91, %87 : vector<128x1xf32>
    %cst_34 = arith.constant 1.000000e+00 : f32
    %93 = vector.broadcast %cst_34 : f32 to vector<128x1xf32>
    %94 = arith.select %90, %92, %93 : vector<128x1xi1>, vector<128x1xf32>
    %cst_35 = arith.constant 0.995999991 : f32
    %95 = vector.broadcast %cst_35 : f32 to vector<128x1xf32>
    %96 = arith.select %90, %95, %88 : vector<128x1xi1>, vector<128x1xf32>
    %cst_36 = arith.constant 1.00401604 : f32
    %97 = vector.broadcast %cst_36 : f32 to vector<128x1xf32>
    %98 = arith.select %90, %97, %87 : vector<128x1xi1>, vector<128x1xf32>
    %cst_37 = arith.constant 1.000000e+00 : f32
    %99 = vector.broadcast %cst_37 : f32 to vector<128x1xf32>
    %100 = arith.mulf %99, %96 : vector<128x1xf32>
    %cst_38 = arith.constant -0.99999988 : f32
    %cst_39 = arith.constant 0.99999988 : f32
    %101 = vector.broadcast %cst_38 : f32 to vector<128x1xf32>
    %102 = arith.maximumf %101, %100 : vector<128x1xf32>
    %103 = vector.broadcast %cst_39 : f32 to vector<128x1xf32>
    %104 = arith.minimumf %103, %102 : vector<128x1xf32>
    %105 = math.log1p %104 : vector<128x1xf32>
    %cst_40 = arith.constant 0.000000e+00 : f32
    %106 = vector.broadcast %cst_40 : f32 to vector<128x1xf32>
    %107 = arith.subf %106, %104 : vector<128x1xf32>
    %108 = math.log1p %107 : vector<128x1xf32>
    %109 = arith.subf %105, %108 : vector<128x1xf32>
    %cst_41 = arith.constant 5.000000e-01 : f32
    %110 = vector.broadcast %cst_41 : f32 to vector<128x1xf32>
    %111 = arith.mulf %110, %109 : vector<128x1xf32>
    %cst_42 = arith.constant 1.000000e+00 : f32
    %112 = vector.broadcast %cst_42 : f32 to vector<128x1xf32>
    %113 = arith.mulf %98, %112 : vector<128x1xf32>
    %114 = arith.mulf %111, %113 : vector<128x1xf32>
    %115 = arith.mulf %94, %114 : vector<128x1xf32>
    %116 = vector.broadcast %115 : vector<128x1xf32> to vector<128x128xf32>
    %117 = arith.mulf %81, %116 : vector<128x128xf32>
    %118 = arith.truncf %117 : vector<128x128xf32> to vector<128x128xbf16>
    %c0_43 = arith.constant 0 : index
    %c0_44 = arith.constant 0 : index
    %119 = vector.load %arg5[%c0_43, %c0_44] : memref<128x128xbf16, #tpu.memory_space<vmem>>, vector<128x128xbf16>
    tpu.vector_store %arg5[%c0_43, %c0_44], %118 {strides = array<i32>} : memref<128x128xbf16, #tpu.memory_space<vmem>>, vector<128x128xbf16>,
    return
  }
  func.func @transform_0(%arg0: i32) -> (i32, i32) {
    %c0_i32 = arith.constant 0 : i32
    %c0_i32_0 = arith.constant 0 : i32
    return %arg0, %c0_i32 : i32, i32
  }
  func.func @transform_1(%arg0: i32) -> (i32, i32) {
    %c0_i32 = arith.constant 0 : i32
    %c0_i32_0 = arith.constant 0 : i32
    %c0_i32_1 = arith.constant 0 : i32
    return %c0_i32, %c0_i32_0 : i32, i32
  }
  func.func @transform_2(%arg0: i32) -> (i32, i32) {
    %c0_i32 = arith.constant 0 : i32
    %c0_i32_0 = arith.constant 0 : i32
    %c0_i32_1 = arith.constant 0 : i32
    return %c0_i32, %c0_i32_0 : i32, i32
  }
  func.func @transform_3(%arg0: i32) -> (i32, i32) {
    %c0_i32 = arith.constant 0 : i32
    %c0_i32_0 = arith.constant 0 : i32
    %c0_i32_1 = arith.constant 0 : i32
    return %c0_i32, %c0_i32_0 : i32, i32
  }
  func.func @transform_4(%arg0: i32) -> (i32, i32) {
    %c0_i32 = arith.constant 0 : i32
    %c0_i32_0 = arith.constant 0 : i32
    return %arg0, %c0_i32 : i32, i32
  }
}

</mosaic_0001>

<llo_original>
// kernel: graph_convolution.3
$region0: #{graph_convolution.3}
  #allocation0 [shape = 'u32[]', space=smem, size = 0x4, offset = 0x4, fixed_abs, tag = 'smem constant byte address 0x4 - core index']
  #allocation1 [shape = 'u32[144,128]{1,0:T(1,128)}', space=vmem, size = 0x12000, scoped, tag = 'internal scratch']
  %s0 = inlined_call_operand.vmem [shape: bf16[384,384], index: 0, kind: input, shape index: {}]
  %s1 = inlined_call_operand.vmem [shape: bf16[384,128], index: 1, kind: input, shape index: {}]
  %s2 = inlined_call_operand.vmem [shape: f32[384,128], index: 2, kind: output, shape index: {}]
  %s3 = sld [smem:[#allocation0]]
  $region41: #{graph_convolution.3} parent=0
    _
  %s5 = ssub.s32 1, %s3
  %s6 = scalar_select 0, %s5, %s3
  loop: start=0, step=1, limit=5
  $region2: #{graph_convolution.3} parent=0 // loop_pre_header
    _
  $region3: #{graph_convolution.3} parent=0 // loop_header
    %s8 = sphi 0, %s12
    %p9 = scmp.ge.s32.totalorder %s8, 5
    %s18 = sphi 0, %s20
    %s21 = sphi 0, %s18
    %s22 = sphi 0, %s21
    %s38 = sphi 0, %s22
    %s42 = sphi 0, %s42
    %s44 = sphi 0, %s42
    %s45 = sphi 0, %s44
    %s59 = sphi 0, %s45
    %s65 = sphi 0, %s67
    %s68 = sphi 0, %s65
    %s69 = sphi 0, %s68
    %s85 = sphi 0, %s69
  $region4: #{graph_convolution.3} parent=0 // loop_header_branch
    %11 = sbr.rel (%p9) target = $region8
  $region5: #{graph_convolution.3} parent=0 // loop_body
    %s13 = ssub.s32 %s8, 1
    %s14 = ssub.s32 %s8, 2
    %s15 = sadd.s32 %s8, 1
    %s16 = ssub.s32 %s8, %s15
    %p17 = scmp.eq.s32.totalorder %s16, 0
    %s19 = sadd.s32 %s18, 1
    %s20 = scalar_select %p17, %s18, %s19
    %p23 = pneg %p17
    %p24 = scmp.eq.s32.totalorder %s8, 2
    %p25 = por %p23, %p24
    %p26 = scmp.ne.s32.totalorder %s18, %s21
    %p27 = scmp.eq.s32.totalorder %s8, 0
    %p28 = por %p26, %p27
    %p29 = scmp.ne.s32.totalorder %s18, %s21
    %p30 = scmp.eq.s32.totalorder %s13, 2
    %p31 = por %p29, %p30
    %p32 = scmp.ne.s32.totalorder %s21, %s22
    %p33 = scmp.eq.s32.totalorder %s13, 0
    %p34 = por %p32, %p33
    %p35 = scmp.ne.s32.totalorder %s21, %s22
    %p36 = scmp.eq.s32.totalorder %s14, 2
    %p37 = por %p35, %p36
    %p39 = scmp.ne.s32.totalorder %s22, %s38
    %p40 = scmp.eq.s32.totalorder %s14, 0
    %p41 = por %p39, %p40
    %s43 = sadd.s32 %s42, 1
    %p46 = scmp.eq.s32.totalorder %s8, 2
    %p47 = scmp.ne.s32.totalorder %s42, %s44
    %p48 = scmp.eq.s32.totalorder %s8, 0
    %p49 = por %p47, %p48
    %p50 = scmp.ne.s32.totalorder %s42, %s44
    %p51 = scmp.eq.s32.totalorder %s13, 2
    %p52 = por %p50, %p51
    %p53 = scmp.ne.s32.totalorder %s44, %s45
    %p54 = scmp.eq.s32.totalorder %s13, 0
    %p55 = por %p53, %p54
    %p56 = scmp.ne.s32.totalorder %s44, %s45
    %p57 = scmp.eq.s32.totalorder %s14, 2
    %p58 = por %p56, %p57
    %p60 = scmp.ne.s32.totalorder %s45, %s59
    %p61 = scmp.eq.s32.totalorder %s14, 0
    %p62 = por %p60, %p61
    %s63 = ssub.s32 %s8, %s15
    %p64 = scmp.eq.s32.totalorder %s63, 0
    %s66 = sadd.s32 %s65, 1
    %s67 = scalar_select %p64, %s65, %s66
    %p70 = pneg %p64
    %p71 = scmp.eq.s32.totalorder %s8, 2
    %p72 = por %p70, %p71
    %p73 = scmp.ne.s32.totalorder %s65, %s68
    %p74 = scmp.eq.s32.totalorder %s8, 0
    %p75 = por %p73, %p74
    %p76 = scmp.ne.s32.totalorder %s65, %s68
    %p77 = scmp.eq.s32.totalorder %s13, 2
    %p78 = por %p76, %p77
    %p79 = scmp.ne.s32.totalorder %s68, %s69
    %p80 = scmp.eq.s32.totalorder %s13, 0
    %p81 = por %p79, %p80
    %p82 = scmp.ne.s32.totalorder %s68, %s69
    %p83 = scmp.eq.s32.totalorder %s14, 2
    %p84 = por %p82, %p83
    %p86 = scmp.ne.s32.totalorder %s69, %s85
    %p87 = scmp.eq.s32.totalorder %s14, 0
    %p88 = por %p86, %p87
    %p89 = scmp.le.s32.totalorder 1, %s8
    %p90 = scmp.lt.s32.totalorder %s8, 4
    %p91 = pnand %p89, %p90
    %p92 = pneg %p91
    // Predicated region
    $region9: #{graph_convolution.3} parent=5 // pred_check
      _
    $region10: #{graph_convolution.3} parent=5 // pred_check_branch
      %94 = sbr.rel (%p91) target = $region12
    $region11: #{graph_convolution.3} parent=5 // pred_region
      %s95 = ssub.s32 %s8, 1
      // Predicated region
      $region13: #{graph_convolution.3} parent=11 // pred_check
        %p96 = pneg %p55
      $region14: #{graph_convolution.3} parent=11 // pred_check_branch
        %98 = sbr.rel (%p96) target = $region16
      $region15: #{graph_convolution.3} parent=11 // pred_region
        _
      $region16: #{graph_convolution.3} parent=11 // pred_fallthru
        _
    $region12: #{graph_convolution.3} parent=5 // pred_fallthru
      _
    %p99 = scmp.lt.s32.totalorder %s8, 3
    // Predicated region
    $region17: #{graph_convolution.3} parent=5 // pred_check
      %p100 = pneg %p99
    $region18: #{graph_convolution.3} parent=5 // pred_check_branch
      %102 = sbr.rel (%p100) target = $region20
    $region19: #{graph_convolution.3} parent=5 // pred_region
      // Predicated region
      $region21: #{graph_convolution.3} parent=19 // pred_check
        %p103 = pneg %p28
      $region22: #{graph_convolution.3} parent=19 // pred_check_branch
        %105 = sbr.rel (%p103) target = $region24
      $region23: #{graph_convolution.3} parent=19 // pred_region
        %s106 = smul.u32 16, %s8
        %p107 = scmp.lt.s32.totalorder %s106, 47
        %s108 = scalar_select %p107, %s106, 47
        %s109 = smul.addr %s108, 3
        %s110 = smul.addr %s109, 4
        %s111 = scalar_lea.vmem %s0, %s110
        %s112 = smul.u32 16, %s8
      $region24: #{graph_convolution.3} parent=19 // pred_fallthru
        _
    $region20: #{graph_convolution.3} parent=5 // pred_fallthru
      _
    %p113 = scmp.le.s32.totalorder 1, %s8
    %p114 = scmp.lt.s32.totalorder %s8, 4
    %p115 = pnand %p113, %p114
    %p116 = pneg %p115
    // Predicated region
    $region25: #{graph_convolution.3} parent=5 // pred_check
      _
    $region26: #{graph_convolution.3} parent=5 // pred_check_branch
      %118 = sbr.rel (%p115) target = $region28
    $region27: #{graph_convolution.3} parent=5 // pred_region
      %s119 = ssub.s32 %s8, 1
      %s120 = smul.u32 16, %s13
      %p121 = scmp.lt.s32.totalorder %s120, 47
      %s122 = scalar_select %p121, %s120, 47
      %s123 = smul.addr %s122, 3
      %s124 = smul.addr %s123, 4
      %s125 = scalar_lea.vmem %s0, %s124
      %p126 = pneg %p34
      %p127 = pneg %p31
      %p128 = pneg %p55
      %p129 = pneg %p52
      %p130 = pneg %p81
      %p131 = pneg %p78
      %s132 = smul.u32 16, %s13
      %p133 = scmp.lt.s32.totalorder %s132, 47
      %s134 = scalar_select %p133, %s132, 47
      %s135 = smul.addr %s134, 8
      %s136 = scalar_lea.vmem %s2, %s135
      %s137 = smul.u32 16, %s13
      %p138 = scmp.lt.s32.totalorder %s137, 47
      %s139 = scalar_select %p138, %s137, 47
      %s140 = smul.addr %s139, 3
      %s141 = smul.addr %s140, 4
      %s142 = scalar_lea.vmem %s0, %s141
      %s143 = smul.u32 16, %s13
      %s144 = smul.u32 16, %s13
      %p145 = scmp.lt.s32.totalorder %s144, 47
      %s146 = scalar_select %p145, %s144, 47
      %s147 = smul.addr %s146, 8
      %s148 = scalar_lea.vmem %s2, %s147
      %s149 = smul.u32 16, %s13
      %v151 = vld [vmem:[%s142] sm:$0xff]
      %v152 = vld [vmem:[%s142 + $0x8] sm:$0xf]
      %v153 = vld [vmem:[%s142 + $0xc] sm:$0xff]
      %v154 = vld [vmem:[%s142 + $0x14] sm:$0xf]
      %v155 = vld [vmem:[%s142 + $0x18] sm:$0xff]
      %v156 = vld [vmem:[%s142 + $0x20] sm:$0xf]
      %v157 = vld [vmem:[%s142 + $0x24] sm:$0xff]
      %v158 = vld [vmem:[%s142 + $0x2c] sm:$0xf]
      %v159 = vld [vmem:[%s142 + $0x30] sm:$0xff]
      %v160 = vld [vmem:[%s142 + $0x38] sm:$0xf]
      %v161 = vld [vmem:[%s142 + $0x3c] sm:$0xff]
      %v162 = vld [vmem:[%s142 + $0x44] sm:$0xf]
      %v163 = vld [vmem:[%s142 + $0x48] sm:$0xff]
      %v164 = vld [vmem:[%s142 + $0x50] sm:$0xf]
      %v165 = vld [vmem:[%s142 + $0x54] sm:$0xff]
      %v166 = vld [vmem:[%s142 + $0x5c] sm:$0xf]
      %v167 = vld [vmem:[%s142 + $0x60] sm:$0xff]
      %v168 = vld [vmem:[%s142 + $0x68] sm:$0xf]
      %v169 = vld [vmem:[%s142 + $0x6c] sm:$0xff]
      %v170 = vld [vmem:[%s142 + $0x74] sm:$0xf]
      %v171 = vld [vmem:[%s142 + $0x78] sm:$0xff]
      %v172 = vld [vmem:[%s142 + $0x80] sm:$0xf]
      %v173 = vld [vmem:[%s142 + $0x84] sm:$0xff]
      %v174 = vld [vmem:[%s142 + $0x8c] sm:$0xf]
      %v175 = vld [vmem:[%s142 + $0x90] sm:$0xff]
      %v176 = vld [vmem:[%s142 + $0x98] sm:$0xf]
      %v177 = vld [vmem:[%s142 + $0x9c] sm:$0xff]
      %v178 = vld [vmem:[%s142 + $0xa4] sm:$0xf]
      %v179 = vld [vmem:[%s142 + $0xa8] sm:$0xff]
      %v180 = vld [vmem:[%s142 + $0xb0] sm:$0xf]
      %v181 = vld [vmem:[%s142 + $0xb4] sm:$0xff]
      %v182 = vld [vmem:[%s142 + $0xbc] sm:$0xf]
      %v183 = vld [vmem:[%s1] sm:$0xf]
      %v184 = vld [vmem:[%s1 + $0x4] sm:$0xf]
      %v185 = vld [vmem:[%s1 + $0x8] sm:$0xf]
      %v186 = vld [vmem:[%s1 + $0xc] sm:$0xf]
      %v187 = vld [vmem:[%s1 + $0x10] sm:$0xf]
      %v188 = vld [vmem:[%s1 + $0x14] sm:$0xf]
      %v189 = vld [vmem:[%s1 + $0x18] sm:$0xf]
      %v190 = vld [vmem:[%s1 + $0x1c] sm:$0xf]
      %v191 = vld [vmem:[%s1 + $0x20] sm:$0xf]
      %v192 = vld [vmem:[%s1 + $0x24] sm:$0xf]
      %v193 = vld [vmem:[%s1 + $0x28] sm:$0xf]
      %v194 = vld [vmem:[%s1 + $0x2c] sm:$0xf]
      %v195 = vld [vmem:[%s1 + $0x30] sm:$0xf]
      %v196 = vld [vmem:[%s1 + $0x34] sm:$0xf]
      %v197 = vld [vmem:[%s1 + $0x38] sm:$0xf]
      %v198 = vld [vmem:[%s1 + $0x3c] sm:$0xf]
      %v199 = vld [vmem:[%s1 + $0x40] sm:$0xf]
      %v200 = vld [vmem:[%s1 + $0x44] sm:$0xf]
      %v201 = vld [vmem:[%s1 + $0x48] sm:$0xf]
      %v202 = vld [vmem:[%s1 + $0x4c] sm:$0xf]
      %v203 = vld [vmem:[%s1 + $0x50] sm:$0xf]
      %v204 = vld [vmem:[%s1 + $0x54] sm:$0xf]
      %v205 = vld [vmem:[%s1 + $0x58] sm:$0xf]
      %v206 = vld [vmem:[%s1 + $0x5c] sm:$0xf]
      %v207 = vld [vmem:[%s1 + $0x60] sm:$0xf]
      %v208 = vld [vmem:[%s1 + $0x64] sm:$0xf]
      %v209 = vld [vmem:[%s1 + $0x68] sm:$0xf]
      %v210 = vld [vmem:[%s1 + $0x6c] sm:$0xf]
      %v211 = vld [vmem:[%s1 + $0x70] sm:$0xf]
      %v212 = vld [vmem:[%s1 + $0x74] sm:$0xf]
      %v213 = vld [vmem:[%s1 + $0x78] sm:$0xf]
      %v214 = vld [vmem:[%s1 + $0x7c] sm:$0xf]
      %v215 = vld [vmem:[%s1 + $0x80] sm:$0xf]
      %v216 = vld [vmem:[%s1 + $0x84] sm:$0xf]
      %v217 = vld [vmem:[%s1 + $0x88] sm:$0xf]
      %v218 = vld [vmem:[%s1 + $0x8c] sm:$0xf]
      %v219 = vld [vmem:[%s1 + $0x90] sm:$0xf]
      %v220 = vld [vmem:[%s1 + $0x94] sm:$0xf]
      %v221 = vld [vmem:[%s1 + $0x98] sm:$0xf]
      %v222 = vld [vmem:[%s1 + $0x9c] sm:$0xf]
      %v223 = vld [vmem:[%s1 + $0xa0] sm:$0xf]
      %v224 = vld [vmem:[%s1 + $0xa4] sm:$0xf]
      %v225 = vld [vmem:[%s1 + $0xa8] sm:$0xf]
      %v226 = vld [vmem:[%s1 + $0xac] sm:$0xf]
      %v227 = vld [vmem:[%s1 + $0xb0] sm:$0xf]
      %v228 = vld [vmem:[%s1 + $0xb4] sm:$0xf]
      %v229 = vld [vmem:[%s1 + $0xb8] sm:$0xf]
      %v230 = vld [vmem:[%s1 + $0xbc] sm:$0xf]
      %v263 = vunpack.c.l.b16 %v151
      %v264 = vunpack.c.h.b16 %v151
      %v265 = vunpack.c.l.b16 %v152
      %v266 = vunpack.c.l.b16 %v153
      %v267 = vunpack.c.h.b16 %v153
      %v268 = vunpack.c.l.b16 %v154
      %v269 = vunpack.c.l.b16 %v155
      %v270 = vunpack.c.h.b16 %v155
      %v271 = vunpack.c.l.b16 %v156
      %v272 = vunpack.c.l.b16 %v157
      %v273 = vunpack.c.h.b16 %v157
      %v274 = vunpack.c.l.b16 %v158
      %v275 = vunpack.c.l.b16 %v159
      %v276 = vunpack.c.h.b16 %v159
      %v277 = vunpack.c.l.b16 %v160
      %v278 = vunpack.c.l.b16 %v161
      %v279 = vunpack.c.h.b16 %v161
      %v280 = vunpack.c.l.b16 %v162
      %v281 = vunpack.c.l.b16 %v163
      %v282 = vunpack.c.h.b16 %v163
      %v283 = vunpack.c.l.b16 %v164
      %v284 = vunpack.c.l.b16 %v165
      %v285 = vunpack.c.h.b16 %v165
      %v286 = vunpack.c.l.b16 %v166
      %v287 = vunpack.c.l.b16 %v167
      %v288 = vunpack.c.h.b16 %v167
      %v289 = vunpack.c.l.b16 %v168
      %v290 = vunpack.c.l.b16 %v169
      %v291 = vunpack.c.h.b16 %v169
      %v292 = vunpack.c.l.b16 %v170
      %v293 = vunpack.c.l.b16 %v171
      %v294 = vunpack.c.h.b16 %v171
      %v295 = vunpack.c.l.b16 %v172
      %v296 = vunpack.c.l.b16 %v173
      %v297 = vunpack.c.h.b16 %v173
      %v298 = vunpack.c.l.b16 %v174
      %v299 = vunpack.c.l.b16 %v175
      %v300 = vunpack.c.h.b16 %v175
      %v301 = vunpack.c.l.b16 %v176
      %v302 = vunpack.c.l.b16 %v177
      %v303 = vunpack.c.h.b16 %v177
      %v304 = vunpack.c.l.b16 %v178
      %v305 = vunpack.c.l.b16 %v179
      %v306 = vunpack.c.h.b16 %v179
      %v307 = vunpack.c.l.b16 %v180
      %v308 = vunpack.c.l.b16 %v181
      %v309 = vunpack.c.h.b16 %v181
      %v310 = vunpack.c.l.b16 %v182
      %v311 = vpack.c.b16 %v266, %v263
      %v312 = vpack.c.b16 %v267, %v264
      %v313 = vpack.c.b16 %v268, %v265
      %v314 = vpack.c.b16 %v272, %v269
      %v315 = vpack.c.b16 %v273, %v270
      %v316 = vpack.c.b16 %v274, %v271
      %v317 = vpack.c.b16 %v278, %v275
      %v318 = vpack.c.b16 %v279, %v276
      %v319 = vpack.c.b16 %v280, %v277
      %v320 = vpack.c.b16 %v284, %v281
      %v321 = vpack.c.b16 %v285, %v282
      %v322 = vpack.c.b16 %v286, %v283
      %v323 = vpack.c.b16 %v290, %v287
      %v324 = vpack.c.b16 %v291, %v288
      %v325 = vpack.c.b16 %v292, %v289
      %v326 = vpack.c.b16 %v296, %v293
      %v327 = vpack.c.b16 %v297, %v294
      %v328 = vpack.c.b16 %v298, %v295
      %v329 = vpack.c.b16 %v302, %v299
      %v330 = vpack.c.b16 %v303, %v300
      %v331 = vpack.c.b16 %v304, %v301
      %v332 = vpack.c.b16 %v308, %v305
      %v333 = vpack.c.b16 %v309, %v306
      %v334 = vpack.c.b16 %v310, %v307
      %v407 = vunpack.c.l.b16 %v183
      %v408 = vunpack.c.l.b16 %v184
      %v409 = vunpack.c.l.b16 %v185
      %v410 = vunpack.c.l.b16 %v186
      %v411 = vunpack.c.l.b16 %v187
      %v412 = vunpack.c.l.b16 %v188
      %v413 = vunpack.c.l.b16 %v189
      %v414 = vunpack.c.l.b16 %v190
      %v415 = vunpack.c.l.b16 %v191
      %v416 = vunpack.c.l.b16 %v192
      %v417 = vunpack.c.l.b16 %v193
      %v418 = vunpack.c.l.b16 %v194
      %v419 = vunpack.c.l.b16 %v195
      %v420 = vunpack.c.l.b16 %v196
      %v421 = vunpack.c.l.b16 %v197
      %v422 = vunpack.c.l.b16 %v198
      %v423 = vunpack.c.l.b16 %v199
      %v424 = vunpack.c.l.b16 %v200
      %v425 = vunpack.c.l.b16 %v201
      %v426 = vunpack.c.l.b16 %v202
      %v427 = vunpack.c.l.b16 %v203
      %v428 = vunpack.c.l.b16 %v204
      %v429 = vunpack.c.l.b16 %v205
      %v430 = vunpack.c.l.b16 %v206
      %v431 = vunpack.c.l.b16 %v207
      %v432 = vunpack.c.l.b16 %v208
      %v433 = vunpack.c.l.b16 %v209
      %v434 = vunpack.c.l.b16 %v210
      %v435 = vunpack.c.l.b16 %v211
      %v436 = vunpack.c.l.b16 %v212
      %v437 = vunpack.c.l.b16 %v213
      %v438 = vunpack.c.l.b16 %v214
      %v439 = vunpack.c.l.b16 %v215
      %v440 = vunpack.c.l.b16 %v216
      %v441 = vunpack.c.l.b16 %v217
      %v442 = vunpack.c.l.b16 %v218
      %v443 = vunpack.c.l.b16 %v219
      %v444 = vunpack.c.l.b16 %v220
      %v445 = vunpack.c.l.b16 %v221
      %v446 = vunpack.c.l.b16 %v222
      %v447 = vunpack.c.l.b16 %v223
      %v448 = vunpack.c.l.b16 %v224
      %v449 = vunpack.c.l.b16 %v225
      %v450 = vunpack.c.l.b16 %v226
      %v451 = vunpack.c.l.b16 %v227
      %v452 = vunpack.c.l.b16 %v228
      %v453 = vunpack.c.l.b16 %v229
      %v454 = vunpack.c.l.b16 %v230
      %v455 = vpack.c.b16 %v408, %v407
      %v456 = vpack.c.b16 %v410, %v409
      %v457 = vpack.c.b16 %v412, %v411
      %v458 = vpack.c.b16 %v414, %v413
      %v459 = vpack.c.b16 %v416, %v415
      %v460 = vpack.c.b16 %v418, %v417
      %v461 = vpack.c.b16 %v420, %v419
      %v462 = vpack.c.b16 %v422, %v421
      %v463 = vpack.c.b16 %v424, %v423
      %v464 = vpack.c.b16 %v426, %v425
      %v465 = vpack.c.b16 %v428, %v427
      %v466 = vpack.c.b16 %v430, %v429
      %v467 = vpack.c.b16 %v432, %v431
      %v468 = vpack.c.b16 %v434, %v433
      %v469 = vpack.c.b16 %v436, %v435
      %v470 = vpack.c.b16 %v438, %v437
      %v471 = vpack.c.b16 %v440, %v439
      %v472 = vpack.c.b16 %v442, %v441
      %v473 = vpack.c.b16 %v444, %v443
      %v474 = vpack.c.b16 %v446, %v445
      %v475 = vpack.c.b16 %v448, %v447
      %v476 = vpack.c.b16 %v450, %v449
      %v477 = vpack.c.b16 %v452, %v451
      %v478 = vpack.c.b16 %v454, %v453
      %503 = vmatprep.subr.bf16.mxu0 0
      %504 = vmatpush1.bf16.msra.mxu0 %v455
      %505 = vmatprep.subr.bf16.mxu0 0
      %506 = vmatpush1.bf16.msra.mxu0 %v456
      %507 = vmatprep.subr.bf16.mxu0 0
      %508 = vmatpush1.bf16.msra.mxu0 %v457
      %509 = vmatprep.subr.bf16.mxu0 0
      %510 = vmatpush1.bf16.msra.mxu0 %v458
      %511 = vmatprep.subr.bf16.mxu0 0
      %512 = vmatpush1.bf16.msra.mxu0 %v459
      %513 = vmatprep.subr.bf16.mxu0 0
      %514 = vmatpush1.bf16.msra.mxu0 %v460
      %515 = vmatprep.subr.bf16.mxu0 0
      %516 = vmatpush1.bf16.msra.mxu0 %v461
      %517 = vmatprep.subr.bf16.mxu0 0
      %518 = vmatpush1.bf16.msra.mxu0 %v462
      %519 = vmatprep.subr.bf16.mxu0 0
      %520 = vmatpush1.bf16.msra.mxu0 %v463
      %521 = vmatprep.subr.bf16.mxu0 0
      %522 = vmatpush1.bf16.msra.mxu0 %v464
      %523 = vmatprep.subr.bf16.mxu0 0
      %524 = vmatpush1.bf16.msra.mxu0 %v465
      %525 = vmatprep.subr.bf16.mxu0 0
      %526 = vmatpush1.bf16.msra.mxu0 %v466
      %527 = vmatprep.subr.bf16.mxu0 0
      %528 = vmatpush1.bf16.msra.mxu0 %v467
      %529 = vmatprep.subr.bf16.mxu0 0
      %530 = vmatpush1.bf16.msra.mxu0 %v468
      %531 = vmatprep.subr.bf16.mxu0 0
      %532 = vmatpush1.bf16.msra.mxu0 %v469
      %533 = vmatprep.subr.bf16.mxu0 0
      %534 = vmatpush1.bf16.msra.mxu0 %v470
      %535 = vmatprep.mubr.bf16.mxu0 %v312
      %536 = vmatmul.mubr.bf16.gmra.mrb[0].mxu0 %v311
      %v537 = vpop.f32.mrb[0].mxu0
      %v538 = vadd.f32 0.0, %v537
      %v539 = vpop.f32.mrb[0].mxu0
      %v540 = vpop.f32.mrb[0].mxu0
      %v541 = vadd.f32 0.0, %v540
      %v542 = vpop.f32.mrb[0].mxu0
      %543 = vmatprep.mubr.bf16.mxu0 %v315
      %544 = vmatmul.mubr.bf16.gmra.mrb[0].mxu0 %v314
      %v545 = vpop.f32.mrb[0].mxu0
      %v546 = vadd.f32 0.0, %v545
      %v547 = vpop.f32.mrb[0].mxu0
      %v548 = vpop.f32.mrb[0].mxu0
      %v549 = vadd.f32 0.0, %v548
      %v550 = vpop.f32.mrb[0].mxu0
      %551 = vmatprep.mubr.bf16.mxu0 %v318
      %552 = vmatmul.mubr.bf16.gmra.mrb[0].mxu0 %v317
      %v553 = vpop.f32.mrb[0].mxu0
      %v554 = vadd.f32 0.0, %v553
      %v555 = vpop.f32.mrb[0].mxu0
      %v556 = vpop.f32.mrb[0].mxu0
      %v557 = vadd.f32 0.0, %v556
      %v558 = vpop.f32.mrb[0].mxu0
      %559 = vmatprep.mubr.bf16.mxu0 %v321
      %560 = vmatmul.mubr.bf16.gmra.mrb[0].mxu0 %v320
      %v561 = vpop.f32.mrb[0].mxu0
      %v562 = vadd.f32 0.0, %v561
      %v563 = vpop.f32.mrb[0].mxu0
      %v564 = vpop.f32.mrb[0].mxu0
      %v565 = vadd.f32 0.0, %v564
      %v566 = vpop.f32.mrb[0].mxu0
      %567 = vmatprep.mubr.bf16.mxu0 %v324
      %568 = vmatmul.mubr.bf16.gmra.mrb[0].mxu0 %v323
      %v569 = vpop.f32.mrb[0].mxu0
      %v570 = vadd.f32 0.0, %v569
      %v571 = vpop.f32.mrb[0].mxu0
      %v572 = vpop.f32.mrb[0].mxu0
      %v573 = vadd.f32 0.0, %v572
      %v574 = vpop.f32.mrb[0].mxu0
      %575 = vmatprep.mubr.bf16.mxu0 %v327
      %576 = vmatmul.mubr.bf16.gmra.mrb[0].mxu0 %v326
      %v577 = vpop.f32.mrb[0].mxu0
      %v578 = vadd.f32 0.0, %v577
      %v579 = vpop.f32.mrb[0].mxu0
      %v580 = vpop.f32.mrb[0].mxu0
      %v581 = vadd.f32 0.0, %v580
      %v582 = vpop.f32.mrb[0].mxu0
      %583 = vmatprep.mubr.bf16.mxu0 %v330
      %584 = vmatmul.mubr.bf16.gmra.mrb[0].mxu0 %v329
      %v585 = vpop.f32.mrb[0].mxu0
      %v586 = vadd.f32 0.0, %v585
      %v587 = vpop.f32.mrb[0].mxu0
      %v588 = vpop.f32.mrb[0].mxu0
      %v589 = vadd.f32 0.0, %v588
      %v590 = vpop.f32.mrb[0].mxu0
      %591 = vmatprep.mubr.bf16.mxu0 %v333
      %592 = vmatmul.mubr.bf16.gmra.mrb[0].mxu0 %v332
      %v593 = vpop.f32.mrb[0].mxu0
      %v594 = vadd.f32 0.0, %v593
      %v595 = vpop.f32.mrb[0].mxu0
      %v596 = vpop.f32.mrb[0].mxu0
      %v597 = vadd.f32 0.0, %v596
      %v598 = vpop.f32.mrb[0].mxu0
      %599 = vdwg.mxu0
      %600 = vmatprep.subr.bf16.mxu0 0
      %601 = vmatpush1.bf16.msra.mxu0 %v471
      %602 = vmatprep.subr.bf16.mxu0 0
      %603 = vmatpush1.bf16.msra.mxu0 %v472
      %604 = vmatprep.subr.bf16.mxu0 0
      %605 = vmatpush1.bf16.msra.mxu0 %v473
      %606 = vmatprep.subr.bf16.mxu0 0
      %607 = vmatpush1.bf16.msra.mxu0 %v474
      %608 = vmatprep.subr.bf16.mxu0 0
      %609 = vmatpush1.bf16.msra.mxu0 %v475
      %610 = vmatprep.subr.bf16.mxu0 0
      %611 = vmatpush1.bf16.msra.mxu0 %v476
      %612 = vmatprep.subr.bf16.mxu0 0
      %613 = vmatpush1.bf16.msra.mxu0 %v477
      %614 = vmatprep.subr.bf16.mxu0 0
      %615 = vmatpush1.bf16.msra.mxu0 %v478
      %616 = vmatprep.subr.bf16.mxu0 0
      %617 = vmatpush1.bf16.msra.mxu0 0
      %618 = vmatprep.subr.bf16.mxu0 0
      %619 = vmatpush1.bf16.msra.mxu0 0
      %620 = vmatprep.subr.bf16.mxu0 0
      %621 = vmatpush1.bf16.msra.mxu0 0
      %622 = vmatprep.subr.bf16.mxu0 0
      %623 = vmatpush1.bf16.msra.mxu0 0
      %624 = vmatprep.subr.bf16.mxu0 0
      %625 = vmatpush1.bf16.msra.mxu0 0
      %626 = vmatprep.subr.bf16.mxu0 0
      %627 = vmatpush1.bf16.msra.mxu0 0
      %628 = vmatprep.subr.bf16.mxu0 0
      %629 = vmatpush1.bf16.msra.mxu0 0
      %630 = vmatprep.subr.bf16.mxu0 0
      %631 = vmatpush1.bf16.msra.mxu0 0
      %632 = vmatprep.mubr.bf16.mxu0 0
      %633 = vmatmul.mubr.bf16.gmra.mrb[0].mxu0 %v313
      %v634 = vpop.f32.mrb[0].mxu0
      %v635 = vadd.f32 %v538, %v634
      %v636 = vpop.f32.mrb[0].mxu0
      %v637 = vpop.f32.mrb[0].mxu0
      %v638 = vadd.f32 %v541, %v637
      %v639 = vpop.f32.mrb[0].mxu0
      %640 = vmatprep.mubr.bf16.mxu0 0
      %641 = vmatmul.mubr.bf16.gmra.mrb[0].mxu0 %v316
      %v642 = vpop.f32.mrb[0].mxu0
      %v643 = vadd.f32 %v546, %v642
      %v644 = vpop.f32.mrb[0].mxu0
      %v645 = vpop.f32.mrb[0].mxu0
      %v646 = vadd.f32 %v549, %v645
      %v647 = vpop.f32.mrb[0].mxu0
      %648 = vmatprep.mubr.bf16.mxu0 0
      %649 = vmatmul.mubr.bf16.gmra.mrb[0].mxu0 %v319
      %v650 = vpop.f32.mrb[0].mxu0
      %v651 = vadd.f32 %v554, %v650
      %v652 = vpop.f32.mrb[0].mxu0
      %v653 = vpop.f32.mrb[0].mxu0
      %v654 = vadd.f32 %v557, %v653
      %v655 = vpop.f32.mrb[0].mxu0
      %656 = vmatprep.mubr.bf16.mxu0 0
      %657 = vmatmul.mubr.bf16.gmra.mrb[0].mxu0 %v322
      %v658 = vpop.f32.mrb[0].mxu0
      %v659 = vadd.f32 %v562, %v658
      %v660 = vpop.f32.mrb[0].mxu0
      %v661 = vpop.f32.mrb[0].mxu0
      %v662 = vadd.f32 %v565, %v661
      %v663 = vpop.f32.mrb[0].mxu0
      %664 = vmatprep.mubr.bf16.mxu0 0
      %665 = vmatmul.mubr.bf16.gmra.mrb[0].mxu0 %v325
      %v666 = vpop.f32.mrb[0].mxu0
      %v667 = vadd.f32 %v570, %v666
      %v668 = vpop.f32.mrb[0].mxu0
      %v669 = vpop.f32.mrb[0].mxu0
      %v670 = vadd.f32 %v573, %v669
      %v671 = vpop.f32.mrb[0].mxu0
      %672 = vmatprep.mubr.bf16.mxu0 0
      %673 = vmatmul.mubr.bf16.gmra.mrb[0].mxu0 %v328
      %v674 = vpop.f32.mrb[0].mxu0
      %v675 = vadd.f32 %v578, %v674
      %v676 = vpop.f32.mrb[0].mxu0
      %v677 = vpop.f32.mrb[0].mxu0
      %v678 = vadd.f32 %v581, %v677
      %v679 = vpop.f32.mrb[0].mxu0
      %680 = vmatprep.mubr.bf16.mxu0 0
      %681 = vmatmul.mubr.bf16.gmra.mrb[0].mxu0 %v331
      %v682 = vpop.f32.mrb[0].mxu0
      %v683 = vadd.f32 %v586, %v682
      %v684 = vpop.f32.mrb[0].mxu0
      %v685 = vpop.f32.mrb[0].mxu0
      %v686 = vadd.f32 %v589, %v685
      %v687 = vpop.f32.mrb[0].mxu0
      %688 = vmatprep.mubr.bf16.mxu0 0
      %689 = vmatmul.mubr.bf16.gmra.mrb[0].mxu0 %v334
      %v690 = vpop.f32.mrb[0].mxu0
      %v691 = vadd.f32 %v594, %v690
      %v692 = vpop.f32.mrb[0].mxu0
      %v693 = vpop.f32.mrb[0].mxu0
      %v694 = vadd.f32 %v597, %v693
      %v695 = vpop.f32.mrb[0].mxu0
      %696 = vdwg.mxu0
      %v697 = vmax.f32 %v635, 0.0
      %v698 = vmax.f32 %v638, 0.0
      %v699 = vmax.f32 %v643, 0.0
      %v700 = vmax.f32 %v646, 0.0
      %v701 = vmax.f32 %v651, 0.0
      %v702 = vmax.f32 %v654, 0.0
      %v703 = vmax.f32 %v659, 0.0
      %v704 = vmax.f32 %v662, 0.0
      %v705 = vmax.f32 %v667, 0.0
      %v706 = vmax.f32 %v670, 0.0
      %v707 = vmax.f32 %v675, 0.0
      %v708 = vmax.f32 %v678, 0.0
      %v709 = vmax.f32 %v683, 0.0
      %v710 = vmax.f32 %v686, 0.0
      %v711 = vmax.f32 %v691, 0.0
      %v712 = vmax.f32 %v694, 0.0
      %713 = vst [vmem:[%s148] sm:$0xff] %v697
      %714 = vst [vmem:[%s148 + $0x8] sm:$0xff] %v698
      %715 = vst [vmem:[%s148 + $0x10] sm:$0xff] %v699
      %716 = vst [vmem:[%s148 + $0x18] sm:$0xff] %v700
      %717 = vst [vmem:[%s148 + $0x20] sm:$0xff] %v701
      %718 = vst [vmem:[%s148 + $0x28] sm:$0xff] %v702
      %719 = vst [vmem:[%s148 + $0x30] sm:$0xff] %v703
      %720 = vst [vmem:[%s148 + $0x38] sm:$0xff] %v704
      %721 = vst [vmem:[%s148 + $0x40] sm:$0xff] %v705
      %722 = vst [vmem:[%s148 + $0x48] sm:$0xff] %v706
      %723 = vst [vmem:[%s148 + $0x50] sm:$0xff] %v707
      %724 = vst [vmem:[%s148 + $0x58] sm:$0xff] %v708
      %725 = vst [vmem:[%s148 + $0x60] sm:$0xff] %v709
      %726 = vst [vmem:[%s148 + $0x68] sm:$0xff] %v710
      %727 = vst [vmem:[%s148 + $0x70] sm:$0xff] %v711
      %728 = vst [vmem:[%s148 + $0x78] sm:$0xff] %v712
      %s729 = smul.u32 16, %s13
      %p730 = scmp.lt.s32.totalorder %s729, 47
      %s731 = scalar_select %p730, %s729, 47
      %s732 = smul.addr %s731, 8
      %s733 = scalar_lea.vmem %s2, %s732
      // Predicated region
      $region29: #{graph_convolution.3} parent=27 // pred_check
        %p734 = pneg %p78
      $region30: #{graph_convolution.3} parent=27 // pred_check_branch
        %736 = sbr.rel (%p734) target = $region32
      $region31: #{graph_convolution.3} parent=27 // pred_region
        %s737 = smul.u32 16, %s13
      $region32: #{graph_convolution.3} parent=27 // pred_fallthru
        _
    $region28: #{graph_convolution.3} parent=5 // pred_fallthru
      _
    %p738 = scmp.le.s32.totalorder 2, %s8
    // Predicated region
    $region33: #{graph_convolution.3} parent=5 // pred_check
      %p739 = pneg %p738
    $region34: #{graph_convolution.3} parent=5 // pred_check_branch
      %741 = sbr.rel (%p739) target = $region36
    $region35: #{graph_convolution.3} parent=5 // pred_region
      %s742 = ssub.s32 %s8, 2
      // Predicated region
      $region37: #{graph_convolution.3} parent=35 // pred_check
        %p743 = pneg %p84
      $region38: #{graph_convolution.3} parent=35 // pred_check_branch
        %745 = sbr.rel (%p743) target = $region40
      $region39: #{graph_convolution.3} parent=35 // pred_region
        %s746 = smul.u32 16, %s14
        %p747 = scmp.lt.s32.totalorder %s746, 47
        %s748 = scalar_select %p747, %s746, 47
        %s749 = smul.addr %s748, 8
        %s750 = scalar_lea.vmem %s2, %s749
      $region40: #{graph_convolution.3} parent=35 // pred_fallthru
        _
    $region36: #{graph_convolution.3} parent=5 // pred_fallthru
      _
  $region6: #{graph_convolution.3} parent=0 // loop_footer
    %s12 = sadd.s32 1, %s8
  $region7: #{graph_convolution.3} parent=0 // loop_footer_branch
    %7 = sbr.rel target = $region3
  $region8: #{graph_convolution.3} parent=0 // loop_exit
    _

// kernel: graph_convolution.2
$region0: #{graph_convolution.2}
  #allocation0 [shape = 'u32[]', space=smem, size = 0x4, offset = 0x4, fixed_abs, tag = 'smem constant byte address 0x4 - core index']
  #allocation1 [shape = 'u32[144,128]{1,0:T(1,128)}', space=vmem, size = 0x12000, scoped, tag = 'internal scratch']
  #allocation2 [shape = 'f32[1,1]{1,0:T(1,128)S(6)}', space=smem, size = 0x200, scoped, tag = 'scoped memory for graph_convolution.2']
  %s0 = inlined_call_operand.vmem [shape: f32[384,128], index: 0, kind: input, shape index: {}]
  %s1 = inlined_call_operand.vmem [shape: f32[128,128], index: 1, kind: input, shape index: {}]
  %s2 = inlined_call_operand.vmem [shape: f32[1,128], index: 2, kind: input, shape index: {}]
  %s3 = inlined_call_operand.<no memory space> [shape: f32[1,1], index: 3, kind: input, shape index: {}]
  %s4 = inlined_call_operand.vmem [shape: bf16[384,128], index: 4, kind: output, shape index: {}]
  %s5 = sld [smem:[#allocation0]]
  $region49: #{graph_convolution.2} parent=0
    _
  %s7 = ssub.s32 1, %s5
  %s8 = scalar_select 0, %s7, %s5
  %9 = sst [smem:[#allocation2]] %s3
  loop: start=0, step=1, limit=5
  $region2: #{graph_convolution.2} parent=0 // loop_pre_header
    _
  $region3: #{graph_convolution.2} parent=0 // loop_header
    %s11 = sphi 0, %s15
    %p12 = scmp.ge.s32.totalorder %s11, 5
    %s21 = sphi 0, %s23
    %s24 = sphi 0, %s21
    %s25 = sphi 0, %s24
    %s41 = sphi 0, %s25
    %s45 = sphi 0, %s45
    %s47 = sphi 0, %s45
    %s48 = sphi 0, %s47
    %s62 = sphi 0, %s48
    %s66 = sphi 0, %s66
    %s68 = sphi 0, %s66
    %s69 = sphi 0, %s68
    %s83 = sphi 0, %s69
    %s87 = sphi 0, %s87
    %s89 = sphi 0, %s87
    %s90 = sphi 0, %s89
    %s104 = sphi 0, %s90
    %s110 = sphi 0, %s112
    %s113 = sphi 0, %s110
    %s114 = sphi 0, %s113
    %s130 = sphi 0, %s114
  $region4: #{graph_convolution.2} parent=0 // loop_header_branch
    %14 = sbr.rel (%p12) target = $region8
  $region5: #{graph_convolution.2} parent=0 // loop_body
    %s16 = ssub.s32 %s11, 1
    %s17 = ssub.s32 %s11, 2
    %s18 = sadd.s32 %s11, 1
    %s19 = ssub.s32 %s11, %s18
    %p20 = scmp.eq.s32.totalorder %s19, 0
    %s22 = sadd.s32 %s21, 1
    %s23 = scalar_select %p20, %s21, %s22
    %p26 = pneg %p20
    %p27 = scmp.eq.s32.totalorder %s11, 2
    %p28 = por %p26, %p27
    %p29 = scmp.ne.s32.totalorder %s21, %s24
    %p30 = scmp.eq.s32.totalorder %s11, 0
    %p31 = por %p29, %p30
    %p32 = scmp.ne.s32.totalorder %s21, %s24
    %p33 = scmp.eq.s32.totalorder %s16, 2
    %p34 = por %p32, %p33
    %p35 = scmp.ne.s32.totalorder %s24, %s25
    %p36 = scmp.eq.s32.totalorder %s16, 0
    %p37 = por %p35, %p36
    %p38 = scmp.ne.s32.totalorder %s24, %s25
    %p39 = scmp.eq.s32.totalorder %s17, 2
    %p40 = por %p38, %p39
    %p42 = scmp.ne.s32.totalorder %s25, %s41
    %p43 = scmp.eq.s32.totalorder %s17, 0
    %p44 = por %p42, %p43
    %s46 = sadd.s32 %s45, 1
    %p49 = scmp.eq.s32.totalorder %s11, 2
    %p50 = scmp.ne.s32.totalorder %s45, %s47
    %p51 = scmp.eq.s32.totalorder %s11, 0
    %p52 = por %p50, %p51
    %p53 = scmp.ne.s32.totalorder %s45, %s47
    %p54 = scmp.eq.s32.totalorder %s16, 2
    %p55 = por %p53, %p54
    %p56 = scmp.ne.s32.totalorder %s47, %s48
    %p57 = scmp.eq.s32.totalorder %s16, 0
    %p58 = por %p56, %p57
    %p59 = scmp.ne.s32.totalorder %s47, %s48
    %p60 = scmp.eq.s32.totalorder %s17, 2
    %p61 = por %p59, %p60
    %p63 = scmp.ne.s32.totalorder %s48, %s62
    %p64 = scmp.eq.s32.totalorder %s17, 0
    %p65 = por %p63, %p64
    %s67 = sadd.s32 %s66, 1
    %p70 = scmp.eq.s32.totalorder %s11, 2
    %p71 = scmp.ne.s32.totalorder %s66, %s68
    %p72 = scmp.eq.s32.totalorder %s11, 0
    %p73 = por %p71, %p72
    %p74 = scmp.ne.s32.totalorder %s66, %s68
    %p75 = scmp.eq.s32.totalorder %s16, 2
    %p76 = por %p74, %p75
    %p77 = scmp.ne.s32.totalorder %s68, %s69
    %p78 = scmp.eq.s32.totalorder %s16, 0
    %p79 = por %p77, %p78
    %p80 = scmp.ne.s32.totalorder %s68, %s69
    %p81 = scmp.eq.s32.totalorder %s17, 2
    %p82 = por %p80, %p81
    %p84 = scmp.ne.s32.totalorder %s69, %s83
    %p85 = scmp.eq.s32.totalorder %s17, 0
    %p86 = por %p84, %p85
    %s88 = sadd.s32 %s87, 1
    %p91 = scmp.eq.s32.totalorder %s11, 2
    %p92 = scmp.ne.s32.totalorder %s87, %s89
    %p93 = scmp.eq.s32.totalorder %s11, 0
    %p94 = por %p92, %p93
    %p95 = scmp.ne.s32.totalorder %s87, %s89
    %p96 = scmp.eq.s32.totalorder %s16, 2
    %p97 = por %p95, %p96
    %p98 = scmp.ne.s32.totalorder %s89, %s90
    %p99 = scmp.eq.s32.totalorder %s16, 0
    %p100 = por %p98, %p99
    %p101 = scmp.ne.s32.totalorder %s89, %s90
    %p102 = scmp.eq.s32.totalorder %s17, 2
    %p103 = por %p101, %p102
    %p105 = scmp.ne.s32.totalorder %s90, %s104
    %p106 = scmp.eq.s32.totalorder %s17, 0
    %p107 = por %p105, %p106
    %s108 = ssub.s32 %s11, %s18
    %p109 = scmp.eq.s32.totalorder %s108, 0
    %s111 = sadd.s32 %s110, 1
    %s112 = scalar_select %p109, %s110, %s111
    %p115 = pneg %p109
    %p116 = scmp.eq.s32.totalorder %s11, 2
    %p117 = por %p115, %p116
    %p118 = scmp.ne.s32.totalorder %s110, %s113
    %p119 = scmp.eq.s32.totalorder %s11, 0
    %p120 = por %p118, %p119
    %p121 = scmp.ne.s32.totalorder %s110, %s113
    %p122 = scmp.eq.s32.totalorder %s16, 2
    %p123 = por %p121, %p122
    %p124 = scmp.ne.s32.totalorder %s113, %s114
    %p125 = scmp.eq.s32.totalorder %s16, 0
    %p126 = por %p124, %p125
    %p127 = scmp.ne.s32.totalorder %s113, %s114
    %p128 = scmp.eq.s32.totalorder %s17, 2
    %p129 = por %p127, %p128
    %p131 = scmp.ne.s32.totalorder %s114, %s130
    %p132 = scmp.eq.s32.totalorder %s17, 0
    %p133 = por %p131, %p132
    %p134 = scmp.le.s32.totalorder 1, %s11
    %p135 = scmp.lt.s32.totalorder %s11, 4
    %p136 = pnand %p134, %p135
    %p137 = pneg %p136
    // Predicated region
    $region9: #{graph_convolution.2} parent=5 // pred_check
      _
    $region10: #{graph_convolution.2} parent=5 // pred_check_branch
      %139 = sbr.rel (%p136) target = $region12
    $region11: #{graph_convolution.2} parent=5 // pred_region
      %s140 = ssub.s32 %s11, 1
      // Predicated region
      $region13: #{graph_convolution.2} parent=11 // pred_check
        %p141 = pneg %p58
      $region14: #{graph_convolution.2} parent=11 // pred_check_branch
        %143 = sbr.rel (%p141) target = $region16
      $region15: #{graph_convolution.2} parent=11 // pred_region
        _
      $region16: #{graph_convolution.2} parent=11 // pred_fallthru
        _
      // Predicated region
      $region17: #{graph_convolution.2} parent=11 // pred_check
        %p144 = pneg %p79
      $region18: #{graph_convolution.2} parent=11 // pred_check_branch
        %146 = sbr.rel (%p144) target = $region20
      $region19: #{graph_convolution.2} parent=11 // pred_region
        _
      $region20: #{graph_convolution.2} parent=11 // pred_fallthru
        _
      // Predicated region
      $region21: #{graph_convolution.2} parent=11 // pred_check
        %p147 = pneg %p100
      $region22: #{graph_convolution.2} parent=11 // pred_check_branch
        %149 = sbr.rel (%p147) target = $region24
      $region23: #{graph_convolution.2} parent=11 // pred_region
        _
      $region24: #{graph_convolution.2} parent=11 // pred_fallthru
        _
    $region12: #{graph_convolution.2} parent=5 // pred_fallthru
      _
    %p150 = scmp.lt.s32.totalorder %s11, 3
    // Predicated region
    $region25: #{graph_convolution.2} parent=5 // pred_check
      %p151 = pneg %p150
    $region26: #{graph_convolution.2} parent=5 // pred_check_branch
      %153 = sbr.rel (%p151) target = $region28
    $region27: #{graph_convolution.2} parent=5 // pred_region
      // Predicated region
      $region29: #{graph_convolution.2} parent=27 // pred_check
        %p154 = pneg %p31
      $region30: #{graph_convolution.2} parent=27 // pred_check_branch
        %156 = sbr.rel (%p154) target = $region32
      $region31: #{graph_convolution.2} parent=27 // pred_region
        %s157 = smul.u32 16, %s11
        %p158 = scmp.lt.s32.totalorder %s157, 47
        %s159 = scalar_select %p158, %s157, 47
        %s160 = smul.addr %s159, 8
        %s161 = scalar_lea.vmem %s0, %s160
        %s162 = smul.u32 16, %s11
      $region32: #{graph_convolution.2} parent=27 // pred_fallthru
        _
    $region28: #{graph_convolution.2} parent=5 // pred_fallthru
      _
    %p163 = scmp.le.s32.totalorder 1, %s11
    %p164 = scmp.lt.s32.totalorder %s11, 4
    %p165 = pnand %p163, %p164
    %p166 = pneg %p165
    // Predicated region
    $region33: #{graph_convolution.2} parent=5 // pred_check
      _
    $region34: #{graph_convolution.2} parent=5 // pred_check_branch
      %168 = sbr.rel (%p165) target = $region36
    $region35: #{graph_convolution.2} parent=5 // pred_region
      %s169 = ssub.s32 %s11, 1
      %s170 = smul.u32 16, %s16
      %p171 = scmp.lt.s32.totalorder %s170, 47
      %s172 = scalar_select %p171, %s170, 47
      %s173 = smul.addr %s172, 8
      %s174 = scalar_lea.vmem %s0, %s173
      %p175 = pneg %p37
      %p176 = pneg %p34
      %p177 = pneg %p58
      %p178 = pneg %p55
      %p179 = pneg %p79
      %p180 = pneg %p76
      %p181 = pneg %p100
      %p182 = pneg %p97
      %p183 = pneg %p126
      %p184 = pneg %p123
      %s185 = smul.u32 16, %s16
      %p186 = scmp.lt.s32.totalorder %s185, 47
      %s187 = scalar_select %p186, %s185, 47
      %s188 = smul.addr %s187, 4
      %s189 = scalar_lea.vmem %s4, %s188
      %s190 = smul.u32 16, %s16
      %p191 = scmp.lt.s32.totalorder %s190, 47
      %s192 = scalar_select %p191, %s190, 47
      %s193 = smul.addr %s192, 8
      %s194 = scalar_lea.vmem %s0, %s193
      %s195 = smul.u32 16, %s16
      %s196 = smul.u32 16, %s16
      %p197 = scmp.lt.s32.totalorder %s196, 47
      %s198 = scalar_select %p197, %s196, 47
      %s199 = smul.addr %s198, 4
      %s200 = scalar_lea.vmem %s4, %s199
      %s201 = smul.u32 16, %s16
      %v202 = vld [vmem:[%s194] sm:$0xff]
      %v203 = vld [vmem:[%s194 + $0x8] sm:$0xff]
      %v204 = vld [vmem:[%s194 + $0x10] sm:$0xff]
      %v205 = vld [vmem:[%s194 + $0x18] sm:$0xff]
      %v206 = vld [vmem:[%s194 + $0x20] sm:$0xff]
      %v207 = vld [vmem:[%s194 + $0x28] sm:$0xff]
      %v208 = vld [vmem:[%s194 + $0x30] sm:$0xff]
      %v209 = vld [vmem:[%s194 + $0x38] sm:$0xff]
      %v210 = vld [vmem:[%s194 + $0x40] sm:$0xff]
      %v211 = vld [vmem:[%s194 + $0x48] sm:$0xff]
      %v212 = vld [vmem:[%s194 + $0x50] sm:$0xff]
      %v213 = vld [vmem:[%s194 + $0x58] sm:$0xff]
      %v214 = vld [vmem:[%s194 + $0x60] sm:$0xff]
      %v215 = vld [vmem:[%s194 + $0x68] sm:$0xff]
      %v216 = vld [vmem:[%s194 + $0x70] sm:$0xff]
      %v217 = vld [vmem:[%s194 + $0x78] sm:$0xff]
      %v218 = vld [vmem:[%s1] sm:$0xff]
      %v219 = vld [vmem:[%s1 + $0x8] sm:$0xff]
      %v220 = vld [vmem:[%s1 + $0x10] sm:$0xff]
      %v221 = vld [vmem:[%s1 + $0x18] sm:$0xff]
      %v222 = vld [vmem:[%s1 + $0x20] sm:$0xff]
      %v223 = vld [vmem:[%s1 + $0x28] sm:$0xff]
      %v224 = vld [vmem:[%s1 + $0x30] sm:$0xff]
      %v225 = vld [vmem:[%s1 + $0x38] sm:$0xff]
      %v226 = vld [vmem:[%s1 + $0x40] sm:$0xff]
      %v227 = vld [vmem:[%s1 + $0x48] sm:$0xff]
      %v228 = vld [vmem:[%s1 + $0x50] sm:$0xff]
      %v229 = vld [vmem:[%s1 + $0x58] sm:$0xff]
      %v230 = vld [vmem:[%s1 + $0x60] sm:$0xff]
      %v231 = vld [vmem:[%s1 + $0x68] sm:$0xff]
      %v232 = vld [vmem:[%s1 + $0x70] sm:$0xff]
      %v233 = vld [vmem:[%s1 + $0x78] sm:$0xff]
      %v234 = vld [vmem:[%s2] sm:$0x1]
      %s235 = sld [smem:[#allocation2]]
      %v236 = vmul.f32 %v202, %v202
      %v237 = vmul.f32 %v203, %v203
      %v238 = vmul.f32 %v204, %v204
      %v239 = vmul.f32 %v205, %v205
      %v240 = vmul.f32 %v206, %v206
      %v241 = vmul.f32 %v207, %v207
      %v242 = vmul.f32 %v208, %v208
      %v243 = vmul.f32 %v209, %v209
      %v244 = vmul.f32 %v210, %v210
      %v245 = vmul.f32 %v211, %v211
      %v246 = vmul.f32 %v212, %v212
      %v247 = vmul.f32 %v213, %v213
      %v248 = vmul.f32 %v214, %v214
      %v249 = vmul.f32 %v215, %v215
      %v250 = vmul.f32 %v216, %v216
      %v251 = vmul.f32 %v217, %v217
      %252 = vadd.xlane.f32.xlu0 %v236
      %v253 = vpop.xlane.xlu0 %252
      %254 = vadd.xlane.f32.xlu0 %v237
      %v255 = vpop.xlane.xlu0 %254
      %256 = vadd.xlane.f32.xlu0 %v238
      %v257 = vpop.xlane.xlu0 %256
      %258 = vadd.xlane.f32.xlu0 %v239
      %v259 = vpop.xlane.xlu0 %258
      %260 = vadd.xlane.f32.xlu0 %v240
      %v261 = vpop.xlane.xlu0 %260
      %262 = vadd.xlane.f32.xlu0 %v241
      %v263 = vpop.xlane.xlu0 %262
      %264 = vadd.xlane.f32.xlu0 %v242
      %v265 = vpop.xlane.xlu0 %264
      %266 = vadd.xlane.f32.xlu0 %v243
      %v267 = vpop.xlane.xlu0 %266
      %268 = vadd.xlane.f32.xlu0 %v244
      %v269 = vpop.xlane.xlu0 %268
      %270 = vadd.xlane.f32.xlu0 %v245
      %v271 = vpop.xlane.xlu0 %270
      %272 = vadd.xlane.f32.xlu0 %v246
      %v273 = vpop.xlane.xlu0 %272
      %274 = vadd.xlane.f32.xlu0 %v247
      %v275 = vpop.xlane.xlu0 %274
      %276 = vadd.xlane.f32.xlu0 %v248
      %v277 = vpop.xlane.xlu0 %276
      %278 = vadd.xlane.f32.xlu0 %v249
      %v279 = vpop.xlane.xlu0 %278
      %280 = vadd.xlane.f32.xlu0 %v250
      %v281 = vpop.xlane.xlu0 %280
      %282 = vadd.xlane.f32.xlu0 %v251
      %v283 = vpop.xlane.xlu0 %282
      %v284 = vmax.f32 %v253, 1e-30
      %v285 = vmax.f32 %v255, 1e-30
      %v286 = vmax.f32 %v257, 1e-30
      %v287 = vmax.f32 %v259, 1e-30
      %v288 = vmax.f32 %v261, 1e-30
      %v289 = vmax.f32 %v263, 1e-30
      %v290 = vmax.f32 %v265, 1e-30
      %v291 = vmax.f32 %v267, 1e-30
      %v292 = vmax.f32 %v269, 1e-30
      %v293 = vmax.f32 %v271, 1e-30
      %v294 = vmax.f32 %v273, 1e-30
      %v295 = vmax.f32 %v275, 1e-30
      %v296 = vmax.f32 %v277, 1e-30
      %v297 = vmax.f32 %v279, 1e-30
      %v298 = vmax.f32 %v281, 1e-30
      %v299 = vmax.f32 %v283, 1e-30
      %v300 = vrsqrt.pop %v284
      %v301 = vrsqrt.pop %v285
      %v302 = vrsqrt.pop %v286
      %v303 = vrsqrt.pop %v287
      %v304 = vrsqrt.pop %v288
      %v305 = vrsqrt.pop %v289
      %v306 = vrsqrt.pop %v290
      %v307 = vrsqrt.pop %v291
      %v308 = vrsqrt.pop %v292
      %v309 = vrsqrt.pop %v293
      %v310 = vrsqrt.pop %v294
      %v311 = vrsqrt.pop %v295
      %v312 = vrsqrt.pop %v296
      %v313 = vrsqrt.pop %v297
      %v314 = vrsqrt.pop %v298
      %v315 = vrsqrt.pop %v299
      %v316 = vmul.f32 %v253, %v300
      %v317 = vmul.f32 %v255, %v301
      %v318 = vmul.f32 %v257, %v302
      %v319 = vmul.f32 %v259, %v303
      %v320 = vmul.f32 %v261, %v304
      %v321 = vmul.f32 %v263, %v305
      %v322 = vmul.f32 %v265, %v306
      %v323 = vmul.f32 %v267, %v307
      %v324 = vmul.f32 %v269, %v308
      %v325 = vmul.f32 %v271, %v309
      %v326 = vmul.f32 %v273, %v310
      %v327 = vmul.f32 %v275, %v311
      %v328 = vmul.f32 %v277, %v312
      %v329 = vmul.f32 %v279, %v313
      %v330 = vmul.f32 %v281, %v314
      %v331 = vmul.f32 %v283, %v315
      %332 = vmatprep.subr.mxu0 0.0
      %333 = vmatpush1.msra.mxu0 %v218
      %334 = vmatprep.subr.mxu0 0.0
      %335 = vmatpush1.msra.mxu0 %v219
      %336 = vmatprep.subr.mxu0 0.0
      %337 = vmatpush1.msra.mxu0 %v220
      %338 = vmatprep.subr.mxu0 0.0
      %339 = vmatpush1.msra.mxu0 %v221
      %340 = vmatprep.subr.mxu0 0.0
      %341 = vmatpush1.msra.mxu0 %v222
      %342 = vmatprep.subr.mxu0 0.0
      %343 = vmatpush1.msra.mxu0 %v223
      %344 = vmatprep.subr.mxu0 0.0
      %345 = vmatpush1.msra.mxu0 %v224
      %346 = vmatprep.subr.mxu0 0.0
      %347 = vmatpush1.msra.mxu0 %v225
      %348 = vmatprep.subr.mxu0 0.0
      %349 = vmatpush1.msra.mxu0 %v226
      %350 = vmatprep.subr.mxu0 0.0
      %351 = vmatpush1.msra.mxu0 %v227
      %352 = vmatprep.subr.mxu0 0.0
      %353 = vmatpush1.msra.mxu0 %v228
      %354 = vmatprep.subr.mxu0 0.0
      %355 = vmatpush1.msra.mxu0 %v229
      %356 = vmatprep.subr.mxu0 0.0
      %357 = vmatpush1.msra.mxu0 %v230
      %358 = vmatprep.subr.mxu0 0.0
      %359 = vmatpush1.msra.mxu0 %v231
      %360 = vmatprep.subr.mxu0 0.0
      %361 = vmatpush1.msra.mxu0 %v232
      %362 = vmatprep.subr.mxu0 0.0
      %363 = vmatpush1.msra.mxu0 %v233
      %364 = vmatprep.subr.mxu0 0.0
      %365 = vmatpush1.msra.mxu0 0.0
      %366 = vmatprep.subr.mxu0 0.0
      %367 = vmatpush1.msra.mxu0 0.0
      %368 = vmatprep.subr.mxu0 0.0
      %369 = vmatpush1.msra.mxu0 0.0
      %370 = vmatprep.subr.mxu0 0.0
      %371 = vmatpush1.msra.mxu0 0.0
      %372 = vmatprep.subr.mxu0 0.0
      %373 = vmatpush1.msra.mxu0 0.0
      %374 = vmatprep.subr.mxu0 0.0
      %375 = vmatpush1.msra.mxu0 0.0
      %376 = vmatprep.subr.mxu0 0.0
      %377 = vmatpush1.msra.mxu0 0.0
      %378 = vmatprep.subr.mxu0 0.0
      %379 = vmatpush1.msra.mxu0 0.0
      %380 = vmatprep.subr.mxu0 0.0
      %381 = vmatpush1.msra.mxu0 0.0
      %382 = vmatprep.subr.mxu0 0.0
      %383 = vmatpush1.msra.mxu0 0.0
      %384 = vmatprep.subr.mxu0 0.0
      %385 = vmatpush1.msra.mxu0 0.0
      %386 = vmatprep.subr.mxu0 0.0
      %387 = vmatpush1.msra.mxu0 0.0
      %388 = vmatprep.subr.mxu0 0.0
      %389 = vmatpush1.msra.mxu0 0.0
      %390 = vmatprep.subr.mxu0 0.0
      %391 = vmatpush1.msra.mxu0 0.0
      %392 = vmatprep.subr.mxu0 0.0
      %393 = vmatpush1.msra.mxu0 0.0
      %394 = vmatprep.subr.mxu0 0.0
      %395 = vmatpush1.msra.mxu0 0.0
      %396 = vmatprep.mubr.f32.mxu0 0.0
      %397 = vmatmul.mubr.f32.gmra.mrb[0].mxu0 %v202
      %v398 = vpop.f32.mrb[0].mxu0
      %v399 = vadd.f32 0.0, %v398
      %v400 = vpop.f32.mrb[0].mxu0
      %401 = vmatprep.mubr.f32.mxu0 0.0
      %402 = vmatmul.mubr.f32.gmra.mrb[0].mxu0 %v203
      %v403 = vpop.f32.mrb[0].mxu0
      %v404 = vadd.f32 0.0, %v403
      %v405 = vpop.f32.mrb[0].mxu0
      %406 = vmatprep.mubr.f32.mxu0 0.0
      %407 = vmatmul.mubr.f32.gmra.mrb[0].mxu0 %v204
      %v408 = vpop.f32.mrb[0].mxu0
      %v409 = vadd.f32 0.0, %v408
      %v410 = vpop.f32.mrb[0].mxu0
      %411 = vmatprep.mubr.f32.mxu0 0.0
      %412 = vmatmul.mubr.f32.gmra.mrb[0].mxu0 %v205
      %v413 = vpop.f32.mrb[0].mxu0
      %v414 = vadd.f32 0.0, %v413
      %v415 = vpop.f32.mrb[0].mxu0
      %416 = vmatprep.mubr.f32.mxu0 0.0
      %417 = vmatmul.mubr.f32.gmra.mrb[0].mxu0 %v206
      %v418 = vpop.f32.mrb[0].mxu0
      %v419 = vadd.f32 0.0, %v418
      %v420 = vpop.f32.mrb[0].mxu0
      %421 = vmatprep.mubr.f32.mxu0 0.0
      %422 = vmatmul.mubr.f32.gmra.mrb[0].mxu0 %v207
      %v423 = vpop.f32.mrb[0].mxu0
      %v424 = vadd.f32 0.0, %v423
      %v425 = vpop.f32.mrb[0].mxu0
      %426 = vmatprep.mubr.f32.mxu0 0.0
      %427 = vmatmul.mubr.f32.gmra.mrb[0].mxu0 %v208
      %v428 = vpop.f32.mrb[0].mxu0
      %v429 = vadd.f32 0.0, %v428
      %v430 = vpop.f32.mrb[0].mxu0
      %431 = vmatprep.mubr.f32.mxu0 0.0
      %432 = vmatmul.mubr.f32.gmra.mrb[0].mxu0 %v209
      %v433 = vpop.f32.mrb[0].mxu0
      %v434 = vadd.f32 0.0, %v433
      %v435 = vpop.f32.mrb[0].mxu0
      %436 = vmatprep.mubr.f32.mxu0 0.0
      %437 = vmatmul.mubr.f32.gmra.mrb[0].mxu0 %v210
      %v438 = vpop.f32.mrb[0].mxu0
      %v439 = vadd.f32 0.0, %v438
      %v440 = vpop.f32.mrb[0].mxu0
      %441 = vmatprep.mubr.f32.mxu0 0.0
      %442 = vmatmul.mubr.f32.gmra.mrb[0].mxu0 %v211
      %v443 = vpop.f32.mrb[0].mxu0
      %v444 = vadd.f32 0.0, %v443
      %v445 = vpop.f32.mrb[0].mxu0
      %446 = vmatprep.mubr.f32.mxu0 0.0
      %447 = vmatmul.mubr.f32.gmra.mrb[0].mxu0 %v212
      %v448 = vpop.f32.mrb[0].mxu0
      %v449 = vadd.f32 0.0, %v448
      %v450 = vpop.f32.mrb[0].mxu0
      %451 = vmatprep.mubr.f32.mxu0 0.0
      %452 = vmatmul.mubr.f32.gmra.mrb[0].mxu0 %v213
      %v453 = vpop.f32.mrb[0].mxu0
      %v454 = vadd.f32 0.0, %v453
      %v455 = vpop.f32.mrb[0].mxu0
      %456 = vmatprep.mubr.f32.mxu0 0.0
      %457 = vmatmul.mubr.f32.gmra.mrb[0].mxu0 %v214
      %v458 = vpop.f32.mrb[0].mxu0
      %v459 = vadd.f32 0.0, %v458
      %v460 = vpop.f32.mrb[0].mxu0
      %461 = vmatprep.mubr.f32.mxu0 0.0
      %462 = vmatmul.mubr.f32.gmra.mrb[0].mxu0 %v215
      %v463 = vpop.f32.mrb[0].mxu0
      %v464 = vadd.f32 0.0, %v463
      %v465 = vpop.f32.mrb[0].mxu0
      %466 = vmatprep.mubr.f32.mxu0 0.0
      %467 = vmatmul.mubr.f32.gmra.mrb[0].mxu0 %v216
      %v468 = vpop.f32.mrb[0].mxu0
      %v469 = vadd.f32 0.0, %v468
      %v470 = vpop.f32.mrb[0].mxu0
      %471 = vmatprep.mubr.f32.mxu0 0.0
      %472 = vmatmul.mubr.f32.gmra.mrb[0].mxu0 %v217
      %v473 = vpop.f32.mrb[0].mxu0
      %v474 = vadd.f32 0.0, %v473
      %v475 = vpop.f32.mrb[0].mxu0
      %476 = vdwg.mxu0
      %v477 = vmul.f32 %v399, %v399
      %v478 = vmul.f32 %v404, %v404
      %v479 = vmul.f32 %v409, %v409
      %v480 = vmul.f32 %v414, %v414
      %v481 = vmul.f32 %v419, %v419
      %v482 = vmul.f32 %v424, %v424
      %v483 = vmul.f32 %v429, %v429
      %v484 = vmul.f32 %v434, %v434
      %v485 = vmul.f32 %v439, %v439
      %v486 = vmul.f32 %v444, %v444
      %v487 = vmul.f32 %v449, %v449
      %v488 = vmul.f32 %v454, %v454
      %v489 = vmul.f32 %v459, %v459
      %v490 = vmul.f32 %v464, %v464
      %v491 = vmul.f32 %v469, %v469
      %v492 = vmul.f32 %v474, %v474
      %493 = vadd.xlane.f32.xlu0 %v477
      %v494 = vpop.xlane.xlu0 %493
      %495 = vadd.xlane.f32.xlu0 %v478
      %v496 = vpop.xlane.xlu0 %495
      %497 = vadd.xlane.f32.xlu0 %v479
      %v498 = vpop.xlane.xlu0 %497
      %499 = vadd.xlane.f32.xlu0 %v480
      %v500 = vpop.xlane.xlu0 %499
      %501 = vadd.xlane.f32.xlu0 %v481
      %v502 = vpop.xlane.xlu0 %501
      %503 = vadd.xlane.f32.xlu0 %v482
      %v504 = vpop.xlane.xlu0 %503
      %505 = vadd.xlane.f32.xlu0 %v483
      %v506 = vpop.xlane.xlu0 %505
      %507 = vadd.xlane.f32.xlu0 %v484
      %v508 = vpop.xlane.xlu0 %507
      %509 = vadd.xlane.f32.xlu0 %v485
      %v510 = vpop.xlane.xlu0 %509
      %511 = vadd.xlane.f32.xlu0 %v486
      %v512 = vpop.xlane.xlu0 %511
      %513 = vadd.xlane.f32.xlu0 %v487
      %v514 = vpop.xlane.xlu0 %513
      %515 = vadd.xlane.f32.xlu0 %v488
      %v516 = vpop.xlane.xlu0 %515
      %517 = vadd.xlane.f32.xlu0 %v489
      %v518 = vpop.xlane.xlu0 %517
      %519 = vadd.xlane.f32.xlu0 %v490
      %v520 = vpop.xlane.xlu0 %519
      %521 = vadd.xlane.f32.xlu0 %v491
      %v522 = vpop.xlane.xlu0 %521
      %523 = vadd.xlane.f32.xlu0 %v492
      %v524 = vpop.xlane.xlu0 %523
      %v525 = vmax.f32 %v494, 1e-30
      %v526 = vmax.f32 %v496, 1e-30
      %v527 = vmax.f32 %v498, 1e-30
      %v528 = vmax.f32 %v500, 1e-30
      %v529 = vmax.f32 %v502, 1e-30
      %v530 = vmax.f32 %v504, 1e-30
      %v531 = vmax.f32 %v506, 1e-30
      %v532 = vmax.f32 %v508, 1e-30
      %v533 = vmax.f32 %v510, 1e-30
      %v534 = vmax.f32 %v512, 1e-30
      %v535 = vmax.f32 %v514, 1e-30
      %v536 = vmax.f32 %v516, 1e-30
      %v537 = vmax.f32 %v518, 1e-30
      %v538 = vmax.f32 %v520, 1e-30
      %v539 = vmax.f32 %v522, 1e-30
      %v540 = vmax.f32 %v524, 1e-30
      %v541 = vrsqrt.pop %v525
      %v542 = vrsqrt.pop %v526
      %v543 = vrsqrt.pop %v527
      %v544 = vrsqrt.pop %v528
      %v545 = vrsqrt.pop %v529
      %v546 = vrsqrt.pop %v530
      %v547 = vrsqrt.pop %v531
      %v548 = vrsqrt.pop %v532
      %v549 = vrsqrt.pop %v533
      %v550 = vrsqrt.pop %v534
      %v551 = vrsqrt.pop %v535
      %v552 = vrsqrt.pop %v536
      %v553 = vrsqrt.pop %v537
      %v554 = vrsqrt.pop %v538
      %v555 = vrsqrt.pop %v539
      %v556 = vrsqrt.pop %v540
      %v557 = vmul.f32 %v494, %v541
      %v558 = vmul.f32 %v496, %v542
      %v559 = vmul.f32 %v498, %v543
      %v560 = vmul.f32 %v500, %v544
      %v561 = vmul.f32 %v502, %v545
      %v562 = vmul.f32 %v504, %v546
      %v563 = vmul.f32 %v506, %v547
      %v564 = vmul.f32 %v508, %v548
      %v565 = vmul.f32 %v510, %v549
      %v566 = vmul.f32 %v512, %v550
      %v567 = vmul.f32 %v514, %v551
      %v568 = vmul.f32 %v516, %v552
      %v569 = vmul.f32 %v518, %v553
      %v570 = vmul.f32 %v520, %v554
      %v571 = vmul.f32 %v522, %v555
      %v572 = vmul.f32 %v524, %v556
      %v573 = vmul.f32 %v557, %v300
      %v574 = vmul.f32 %v558, %v301
      %v575 = vmul.f32 %v559, %v302
      %v576 = vmul.f32 %v560, %v303
      %v577 = vmul.f32 %v561, %v304
      %v578 = vmul.f32 %v562, %v305
      %v579 = vmul.f32 %v563, %v306
      %v580 = vmul.f32 %v564, %v307
      %v581 = vmul.f32 %v565, %v308
      %v582 = vmul.f32 %v566, %v309
      %v583 = vmul.f32 %v567, %v310
      %v584 = vmul.f32 %v568, %v311
      %v585 = vmul.f32 %v569, %v312
      %v586 = vmul.f32 %v570, %v313
      %v587 = vmul.f32 %v571, %v314
      %v588 = vmul.f32 %v572, %v315
      %v589 = vmax.f32 %v316, -0.9999999
      %v590 = vmax.f32 %v317, -0.9999999
      %v591 = vmax.f32 %v318, -0.9999999
      %v592 = vmax.f32 %v319, -0.9999999
      %v593 = vmax.f32 %v320, -0.9999999
      %v594 = vmax.f32 %v321, -0.9999999
      %v595 = vmax.f32 %v322, -0.9999999
      %v596 = vmax.f32 %v323, -0.9999999
      %v597 = vmax.f32 %v324, -0.9999999
      %v598 = vmax.f32 %v325, -0.9999999
      %v599 = vmax.f32 %v326, -0.9999999
      %v600 = vmax.f32 %v327, -0.9999999
      %v601 = vmax.f32 %v328, -0.9999999
      %v602 = vmax.f32 %v329, -0.9999999
      %v603 = vmax.f32 %v330, -0.9999999
      %v604 = vmax.f32 %v331, -0.9999999
      %v605 = vmin.f32 %v589, 0.9999999
      %v606 = vmin.f32 %v590, 0.9999999
      %v607 = vmin.f32 %v591, 0.9999999
      %v608 = vmin.f32 %v592, 0.9999999
      %v609 = vmin.f32 %v593, 0.9999999
      %v610 = vmin.f32 %v594, 0.9999999
      %v611 = vmin.f32 %v595, 0.9999999
      %v612 = vmin.f32 %v596, 0.9999999
      %v613 = vmin.f32 %v597, 0.9999999
      %v614 = vmin.f32 %v598, 0.9999999
      %v615 = vmin.f32 %v599, 0.9999999
      %v616 = vmin.f32 %v600, 0.9999999
      %v617 = vmin.f32 %v601, 0.9999999
      %v618 = vmin.f32 %v602, 0.9999999
      %v619 = vmin.f32 %v603, 0.9999999
      %v620 = vmin.f32 %v604, 0.9999999
      %v621 = vadd.f32 %v605, 1.0
      %v622 = vlog2.pop %v621
      %v623 = vmul.f32 %v622, 0.6931472
      %v624 = vmul.f32 -0.5, %v605
      %v625 = vadd.f32 %v624, 1.0
      %v626 = vmul.f32 %v625, %v605
      %v627 = vand.u32 2147483647, %v605
      %vm628 = vcmp.lt.f32.partialorder %v627, 0.0004427343
      %v629 = vsel %vm628, %v626, %v623
      %v630 = vadd.f32 %v606, 1.0
      %v631 = vlog2.pop %v630
      %v632 = vmul.f32 %v631, 0.6931472
      %v633 = vmul.f32 -0.5, %v606
      %v634 = vadd.f32 %v633, 1.0
      %v635 = vmul.f32 %v634, %v606
      %v636 = vand.u32 2147483647, %v606
      %vm637 = vcmp.lt.f32.partialorder %v636, 0.0004427343
      %v638 = vsel %vm637, %v635, %v632
      %v639 = vadd.f32 %v607, 1.0
      %v640 = vlog2.pop %v639
      %v641 = vmul.f32 %v640, 0.6931472
      %v642 = vmul.f32 -0.5, %v607
      %v643 = vadd.f32 %v642, 1.0
      %v644 = vmul.f32 %v643, %v607
      %v645 = vand.u32 2147483647, %v607
      %vm646 = vcmp.lt.f32.partialorder %v645, 0.0004427343
      %v647 = vsel %vm646, %v644, %v641
      %v648 = vadd.f32 %v608, 1.0
      %v649 = vlog2.pop %v648
      %v650 = vmul.f32 %v649, 0.6931472
      %v651 = vmul.f32 -0.5, %v608
      %v652 = vadd.f32 %v651, 1.0
      %v653 = vmul.f32 %v652, %v608
      %v654 = vand.u32 2147483647, %v608
      %vm655 = vcmp.lt.f32.partialorder %v654, 0.0004427343
      %v656 = vsel %vm655, %v653, %v650
      %v657 = vadd.f32 %v609, 1.0
      %v658 = vlog2.pop %v657
      %v659 = vmul.f32 %v658, 0.6931472
      %v660 = vmul.f32 -0.5, %v609
      %v661 = vadd.f32 %v660, 1.0
      %v662 = vmul.f32 %v661, %v609
      %v663 = vand.u32 2147483647, %v609
      %vm664 = vcmp.lt.f32.partialorder %v663, 0.0004427343
      %v665 = vsel %vm664, %v662, %v659
      %v666 = vadd.f32 %v610, 1.0
      %v667 = vlog2.pop %v666
      %v668 = vmul.f32 %v667, 0.6931472
      %v669 = vmul.f32 -0.5, %v610
      %v670 = vadd.f32 %v669, 1.0
      %v671 = vmul.f32 %v670, %v610
      %v672 = vand.u32 2147483647, %v610
      %vm673 = vcmp.lt.f32.partialorder %v672, 0.0004427343
      %v674 = vsel %vm673, %v671, %v668
      %v675 = vadd.f32 %v611, 1.0
      %v676 = vlog2.pop %v675
      %v677 = vmul.f32 %v676, 0.6931472
      %v678 = vmul.f32 -0.5, %v611
      %v679 = vadd.f32 %v678, 1.0
      %v680 = vmul.f32 %v679, %v611
      %v681 = vand.u32 2147483647, %v611
      %vm682 = vcmp.lt.f32.partialorder %v681, 0.0004427343
      %v683 = vsel %vm682, %v680, %v677
      %v684 = vadd.f32 %v612, 1.0
      %v685 = vlog2.pop %v684
      %v686 = vmul.f32 %v685, 0.6931472
      %v687 = vmul.f32 -0.5, %v612
      %v688 = vadd.f32 %v687, 1.0
      %v689 = vmul.f32 %v688, %v612
      %v690 = vand.u32 2147483647, %v612
      %vm691 = vcmp.lt.f32.partialorder %v690, 0.0004427343
      %v692 = vsel %vm691, %v689, %v686
      %v693 = vadd.f32 %v613, 1.0
      %v694 = vlog2.pop %v693
      %v695 = vmul.f32 %v694, 0.6931472
      %v696 = vmul.f32 -0.5, %v613
      %v697 = vadd.f32 %v696, 1.0
      %v698 = vmul.f32 %v697, %v613
      %v699 = vand.u32 2147483647, %v613
      %vm700 = vcmp.lt.f32.partialorder %v699, 0.0004427343
      %v701 = vsel %vm700, %v698, %v695
      %v702 = vadd.f32 %v614, 1.0
      %v703 = vlog2.pop %v702
      %v704 = vmul.f32 %v703, 0.6931472
      %v705 = vmul.f32 -0.5, %v614
      %v706 = vadd.f32 %v705, 1.0
      %v707 = vmul.f32 %v706, %v614
      %v708 = vand.u32 2147483647, %v614
      %vm709 = vcmp.lt.f32.partialorder %v708, 0.0004427343
      %v710 = vsel %vm709, %v707, %v704
      %v711 = vadd.f32 %v615, 1.0
      %v712 = vlog2.pop %v711
      %v713 = vmul.f32 %v712, 0.6931472
      %v714 = vmul.f32 -0.5, %v615
      %v715 = vadd.f32 %v714, 1.0
      %v716 = vmul.f32 %v715, %v615
      %v717 = vand.u32 2147483647, %v615
      %vm718 = vcmp.lt.f32.partialorder %v717, 0.0004427343
      %v719 = vsel %vm718, %v716, %v713
      %v720 = vadd.f32 %v616, 1.0
      %v721 = vlog2.pop %v720
      %v722 = vmul.f32 %v721, 0.6931472
      %v723 = vmul.f32 -0.5, %v616
      %v724 = vadd.f32 %v723, 1.0
      %v725 = vmul.f32 %v724, %v616
      %v726 = vand.u32 2147483647, %v616
      %vm727 = vcmp.lt.f32.partialorder %v726, 0.0004427343
      %v728 = vsel %vm727, %v725, %v722
      %v729 = vadd.f32 %v617, 1.0
      %v730 = vlog2.pop %v729
      %v731 = vmul.f32 %v730, 0.6931472
      %v732 = vmul.f32 -0.5, %v617
      %v733 = vadd.f32 %v732, 1.0
      %v734 = vmul.f32 %v733, %v617
      %v735 = vand.u32 2147483647, %v617
      %vm736 = vcmp.lt.f32.partialorder %v735, 0.0004427343
      %v737 = vsel %vm736, %v734, %v731
      %v738 = vadd.f32 %v618, 1.0
      %v739 = vlog2.pop %v738
      %v740 = vmul.f32 %v739, 0.6931472
      %v741 = vmul.f32 -0.5, %v618
      %v742 = vadd.f32 %v741, 1.0
      %v743 = vmul.f32 %v742, %v618
      %v744 = vand.u32 2147483647, %v618
      %vm745 = vcmp.lt.f32.partialorder %v744, 0.0004427343
      %v746 = vsel %vm745, %v743, %v740
      %v747 = vadd.f32 %v619, 1.0
      %v748 = vlog2.pop %v747
      %v749 = vmul.f32 %v748, 0.6931472
      %v750 = vmul.f32 -0.5, %v619
      %v751 = vadd.f32 %v750, 1.0
      %v752 = vmul.f32 %v751, %v619
      %v753 = vand.u32 2147483647, %v619
      %vm754 = vcmp.lt.f32.partialorder %v753, 0.0004427343
      %v755 = vsel %vm754, %v752, %v749
      %v756 = vadd.f32 %v620, 1.0
      %v757 = vlog2.pop %v756
      %v758 = vmul.f32 %v757, 0.6931472
      %v759 = vmul.f32 -0.5, %v620
      %v760 = vadd.f32 %v759, 1.0
      %v761 = vmul.f32 %v760, %v620
      %v762 = vand.u32 2147483647, %v620
      %vm763 = vcmp.lt.f32.partialorder %v762, 0.0004427343
      %v764 = vsel %vm763, %v761, %v758
      %v765 = vsub.f32 0.0, %v605
      %v766 = vsub.f32 0.0, %v606
      %v767 = vsub.f32 0.0, %v607
      %v768 = vsub.f32 0.0, %v608
      %v769 = vsub.f32 0.0, %v609
      %v770 = vsub.f32 0.0, %v610
      %v771 = vsub.f32 0.0, %v611
      %v772 = vsub.f32 0.0, %v612
      %v773 = vsub.f32 0.0, %v613
      %v774 = vsub.f32 0.0, %v614
      %v775 = vsub.f32 0.0, %v615
      %v776 = vsub.f32 0.0, %v616
      %v777 = vsub.f32 0.0, %v617
      %v778 = vsub.f32 0.0, %v618
      %v779 = vsub.f32 0.0, %v619
      %v780 = vsub.f32 0.0, %v620
      %v781 = vadd.f32 %v765, 1.0
      %v782 = vlog2.pop %v781
      %v783 = vmul.f32 %v782, 0.6931472
      %v784 = vmul.f32 -0.5, %v765
      %v785 = vadd.f32 %v784, 1.0
      %v786 = vmul.f32 %v785, %v765
      %v787 = vand.u32 2147483647, %v765
      %vm788 = vcmp.lt.f32.partialorder %v787, 0.0004427343
      %v789 = vsel %vm788, %v786, %v783
      %v790 = vadd.f32 %v766, 1.0
      %v791 = vlog2.pop %v790
      %v792 = vmul.f32 %v791, 0.6931472
      %v793 = vmul.f32 -0.5, %v766
      %v794 = vadd.f32 %v793, 1.0
      %v795 = vmul.f32 %v794, %v766
      %v796 = vand.u32 2147483647, %v766
      %vm797 = vcmp.lt.f32.partialorder %v796, 0.0004427343
      %v798 = vsel %vm797, %v795, %v792
      %v799 = vadd.f32 %v767, 1.0
      %v800 = vlog2.pop %v799
      %v801 = vmul.f32 %v800, 0.6931472
      %v802 = vmul.f32 -0.5, %v767
      %v803 = vadd.f32 %v802, 1.0
      %v804 = vmul.f32 %v803, %v767
      %v805 = vand.u32 2147483647, %v767
      %vm806 = vcmp.lt.f32.partialorder %v805, 0.0004427343
      %v807 = vsel %vm806, %v804, %v801
      %v808 = vadd.f32 %v768, 1.0
      %v809 = vlog2.pop %v808
      %v810 = vmul.f32 %v809, 0.6931472
      %v811 = vmul.f32 -0.5, %v768
      %v812 = vadd.f32 %v811, 1.0
      %v813 = vmul.f32 %v812, %v768
      %v814 = vand.u32 2147483647, %v768
      %vm815 = vcmp.lt.f32.partialorder %v814, 0.0004427343
      %v816 = vsel %vm815, %v813, %v810
      %v817 = vadd.f32 %v769, 1.0
      %v818 = vlog2.pop %v817
      %v819 = vmul.f32 %v818, 0.6931472
      %v820 = vmul.f32 -0.5, %v769
      %v821 = vadd.f32 %v820, 1.0
      %v822 = vmul.f32 %v821, %v769
      %v823 = vand.u32 2147483647, %v769
      %vm824 = vcmp.lt.f32.partialorder %v823, 0.0004427343
      %v825 = vsel %vm824, %v822, %v819
      %v826 = vadd.f32 %v770, 1.0
      %v827 = vlog2.pop %v826
      %v828 = vmul.f32 %v827, 0.6931472
      %v829 = vmul.f32 -0.5, %v770
      %v830 = vadd.f32 %v829, 1.0
      %v831 = vmul.f32 %v830, %v770
      %v832 = vand.u32 2147483647, %v770
      %vm833 = vcmp.lt.f32.partialorder %v832, 0.0004427343
      %v834 = vsel %vm833, %v831, %v828
      %v835 = vadd.f32 %v771, 1.0
      %v836 = vlog2.pop %v835
      %v837 = vmul.f32 %v836, 0.6931472
      %v838 = vmul.f32 -0.5, %v771
      %v839 = vadd.f32 %v838, 1.0
      %v840 = vmul.f32 %v839, %v771
      %v841 = vand.u32 2147483647, %v771
      %vm842 = vcmp.lt.f32.partialorder %v841, 0.0004427343
      %v843 = vsel %vm842, %v840, %v837
      %v844 = vadd.f32 %v772, 1.0
      %v845 = vlog2.pop %v844
      %v846 = vmul.f32 %v845, 0.6931472
      %v847 = vmul.f32 -0.5, %v772
      %v848 = vadd.f32 %v847, 1.0
      %v849 = vmul.f32 %v848, %v772
      %v850 = vand.u32 2147483647, %v772
      %vm851 = vcmp.lt.f32.partialorder %v850, 0.0004427343
      %v852 = vsel %vm851, %v849, %v846
      %v853 = vadd.f32 %v773, 1.0
      %v854 = vlog2.pop %v853
      %v855 = vmul.f32 %v854, 0.6931472
      %v856 = vmul.f32 -0.5, %v773
      %v857 = vadd.f32 %v856, 1.0
      %v858 = vmul.f32 %v857, %v773
      %v859 = vand.u32 2147483647, %v773
      %vm860 = vcmp.lt.f32.partialorder %v859, 0.0004427343
      %v861 = vsel %vm860, %v858, %v855
      %v862 = vadd.f32 %v774, 1.0
      %v863 = vlog2.pop %v862
      %v864 = vmul.f32 %v863, 0.6931472
      %v865 = vmul.f32 -0.5, %v774
      %v866 = vadd.f32 %v865, 1.0
      %v867 = vmul.f32 %v866, %v774
      %v868 = vand.u32 2147483647, %v774
      %vm869 = vcmp.lt.f32.partialorder %v868, 0.0004427343
      %v870 = vsel %vm869, %v867, %v864
      %v871 = vadd.f32 %v775, 1.0
      %v872 = vlog2.pop %v871
      %v873 = vmul.f32 %v872, 0.6931472
      %v874 = vmul.f32 -0.5, %v775
      %v875 = vadd.f32 %v874, 1.0
      %v876 = vmul.f32 %v875, %v775
      %v877 = vand.u32 2147483647, %v775
      %vm878 = vcmp.lt.f32.partialorder %v877, 0.0004427343
      %v879 = vsel %vm878, %v876, %v873
      %v880 = vadd.f32 %v776, 1.0
      %v881 = vlog2.pop %v880
      %v882 = vmul.f32 %v881, 0.6931472
      %v883 = vmul.f32 -0.5, %v776
      %v884 = vadd.f32 %v883, 1.0
      %v885 = vmul.f32 %v884, %v776
      %v886 = vand.u32 2147483647, %v776
      %vm887 = vcmp.lt.f32.partialorder %v886, 0.0004427343
      %v888 = vsel %vm887, %v885, %v882
      %v889 = vadd.f32 %v777, 1.0
      %v890 = vlog2.pop %v889
      %v891 = vmul.f32 %v890, 0.6931472
      %v892 = vmul.f32 -0.5, %v777
      %v893 = vadd.f32 %v892, 1.0
      %v894 = vmul.f32 %v893, %v777
      %v895 = vand.u32 2147483647, %v777
      %vm896 = vcmp.lt.f32.partialorder %v895, 0.0004427343
      %v897 = vsel %vm896, %v894, %v891
      %v898 = vadd.f32 %v778, 1.0
      %v899 = vlog2.pop %v898
      %v900 = vmul.f32 %v899, 0.6931472
      %v901 = vmul.f32 -0.5, %v778
      %v902 = vadd.f32 %v901, 1.0
      %v903 = vmul.f32 %v902, %v778
      %v904 = vand.u32 2147483647, %v778
      %vm905 = vcmp.lt.f32.partialorder %v904, 0.0004427343
      %v906 = vsel %vm905, %v903, %v900
      %v907 = vadd.f32 %v779, 1.0
      %v908 = vlog2.pop %v907
      %v909 = vmul.f32 %v908, 0.6931472
      %v910 = vmul.f32 -0.5, %v779
      %v911 = vadd.f32 %v910, 1.0
      %v912 = vmul.f32 %v911, %v779
      %v913 = vand.u32 2147483647, %v779
      %vm914 = vcmp.lt.f32.partialorder %v913, 0.0004427343
      %v915 = vsel %vm914, %v912, %v909
      %v916 = vadd.f32 %v780, 1.0
      %v917 = vlog2.pop %v916
      %v918 = vmul.f32 %v917, 0.6931472
      %v919 = vmul.f32 -0.5, %v780
      %v920 = vadd.f32 %v919, 1.0
      %v921 = vmul.f32 %v920, %v780
      %v922 = vand.u32 2147483647, %v780
      %vm923 = vcmp.lt.f32.partialorder %v922, 0.0004427343
      %v924 = vsel %vm923, %v921, %v918
      %v925 = vsub.f32 %v629, %v789
      %v926 = vsub.f32 %v638, %v798
      %v927 = vsub.f32 %v647, %v807
      %v928 = vsub.f32 %v656, %v816
      %v929 = vsub.f32 %v665, %v825
      %v930 = vsub.f32 %v674, %v834
      %v931 = vsub.f32 %v683, %v843
      %v932 = vsub.f32 %v692, %v852
      %v933 = vsub.f32 %v701, %v861
      %v934 = vsub.f32 %v710, %v870
      %v935 = vsub.f32 %v719, %v879
      %v936 = vsub.f32 %v728, %v888
      %v937 = vsub.f32 %v737, %v897
      %v938 = vsub.f32 %v746, %v906
      %v939 = vsub.f32 %v755, %v915
      %v940 = vsub.f32 %v764, %v924
      %v941 = vmul.f32 %v925, 0.5
      %v942 = vmul.f32 %v926, 0.5
      %v943 = vmul.f32 %v927, 0.5
      %v944 = vmul.f32 %v928, 0.5
      %v945 = vmul.f32 %v929, 0.5
      %v946 = vmul.f32 %v930, 0.5
      %v947 = vmul.f32 %v931, 0.5
      %v948 = vmul.f32 %v932, 0.5
      %v949 = vmul.f32 %v933, 0.5
      %v950 = vmul.f32 %v934, 0.5
      %v951 = vmul.f32 %v935, 0.5
      %v952 = vmul.f32 %v936, 0.5
      %v953 = vmul.f32 %v937, 0.5
      %v954 = vmul.f32 %v938, 0.5
      %v955 = vmul.f32 %v939, 0.5
      %v956 = vmul.f32 %v940, 0.5
      %v957 = vmul.f32 %v573, %v941
      %v958 = vmul.f32 %v574, %v942
      %v959 = vmul.f32 %v575, %v943
      %v960 = vmul.f32 %v576, %v944
      %v961 = vmul.f32 %v577, %v945
      %v962 = vmul.f32 %v578, %v946
      %v963 = vmul.f32 %v579, %v947
      %v964 = vmul.f32 %v580, %v948
      %v965 = vmul.f32 %v581, %v949
      %v966 = vmul.f32 %v582, %v950
      %v967 = vmul.f32 %v583, %v951
      %v968 = vmul.f32 %v584, %v952
      %v969 = vmul.f32 %v585, %v953
      %v970 = vmul.f32 %v586, %v954
      %v971 = vmul.f32 %v587, %v955
      %v972 = vmul.f32 %v588, %v956
      %v973 = vtanh.pop %v957
      %v974 = vtanh.pop %v958
      %v975 = vtanh.pop %v959
      %v976 = vtanh.pop %v960
      %v977 = vtanh.pop %v961
      %v978 = vtanh.pop %v962
      %v979 = vtanh.pop %v963
      %v980 = vtanh.pop %v964
      %v981 = vtanh.pop %v965
      %v982 = vtanh.pop %v966
      %v983 = vtanh.pop %v967
      %v984 = vtanh.pop %v968
      %v985 = vtanh.pop %v969
      %v986 = vtanh.pop %v970
      %v987 = vtanh.pop %v971
      %v988 = vtanh.pop %v972
      %v989 = vmul.f32 %v973, %v541
      %v990 = vmul.f32 %v974, %v542
      %v991 = vmul.f32 %v975, %v543
      %v992 = vmul.f32 %v976, %v544
      %v993 = vmul.f32 %v977, %v545
      %v994 = vmul.f32 %v978, %v546
      %v995 = vmul.f32 %v979, %v547
      %v996 = vmul.f32 %v980, %v548
      %v997 = vmul.f32 %v981, %v549
      %v998 = vmul.f32 %v982, %v550
      %v999 = vmul.f32 %v983, %v551
      %v1000 = vmul.f32 %v984, %v552
      %v1001 = vmul.f32 %v985, %v553
      %v1002 = vmul.f32 %v986, %v554
      %v1003 = vmul.f32 %v987, %v555
      %v1004 = vmul.f32 %v988, %v556
      %vm1005 = vcmp.eq.f32.partialorder %v494, 0.0
      %vm1006 = vcmp.eq.f32.partialorder %v496, 0.0
      %vm1007 = vcmp.eq.f32.partialorder %v498, 0.0
      %vm1008 = vcmp.eq.f32.partialorder %v500, 0.0
      %vm1009 = vcmp.eq.f32.partialorder %v502, 0.0
      %vm1010 = vcmp.eq.f32.partialorder %v504, 0.0
      %vm1011 = vcmp.eq.f32.partialorder %v506, 0.0
      %vm1012 = vcmp.eq.f32.partialorder %v508, 0.0
      %vm1013 = vcmp.eq.f32.partialorder %v510, 0.0
      %vm1014 = vcmp.eq.f32.partialorder %v512, 0.0
      %vm1015 = vcmp.eq.f32.partialorder %v514, 0.0
      %vm1016 = vcmp.eq.f32.partialorder %v516, 0.0
      %vm1017 = vcmp.eq.f32.partialorder %v518, 0.0
      %vm1018 = vcmp.eq.f32.partialorder %v520, 0.0
      %vm1019 = vcmp.eq.f32.partialorder %v522, 0.0
      %vm1020 = vcmp.eq.f32.partialorder %v524, 0.0
      %v1021 = vsel %vm1005, 0.0, %v989
      %v1022 = vsel %vm1006, 0.0, %v990
      %v1023 = vsel %vm1007, 0.0, %v991
      %v1024 = vsel %vm1008, 0.0, %v992
      %v1025 = vsel %vm1009, 0.0, %v993
      %v1026 = vsel %vm1010, 0.0, %v994
      %v1027 = vsel %vm1011, 0.0, %v995
      %v1028 = vsel %vm1012, 0.0, %v996
      %v1029 = vsel %vm1013, 0.0, %v997
      %v1030 = vsel %vm1014, 0.0, %v998
      %v1031 = vsel %vm1015, 0.0, %v999
      %v1032 = vsel %vm1016, 0.0, %v1000
      %v1033 = vsel %vm1017, 0.0, %v1001
      %v1034 = vsel %vm1018, 0.0, %v1002
      %v1035 = vsel %vm1019, 0.0, %v1003
      %v1036 = vsel %vm1020, 0.0, %v1004
      %v1037 = vmul.f32 %v1021, %v399
      %v1038 = vmul.f32 %v1022, %v404
      %v1039 = vmul.f32 %v1023, %v409
      %v1040 = vmul.f32 %v1024, %v414
      %v1041 = vmul.f32 %v1025, %v419
      %v1042 = vmul.f32 %v1026, %v424
      %v1043 = vmul.f32 %v1027, %v429
      %v1044 = vmul.f32 %v1028, %v434
      %v1045 = vmul.f32 %v1029, %v439
      %v1046 = vmul.f32 %v1030, %v444
      %v1047 = vmul.f32 %v1031, %v449
      %v1048 = vmul.f32 %v1032, %v454
      %v1049 = vmul.f32 %v1033, %v459
      %v1050 = vmul.f32 %v1034, %v464
      %v1051 = vmul.f32 %v1035, %v469
      %v1052 = vmul.f32 %v1036, %v474
      %v1053 = vmul.f32 %v1021, %v1021
      %v1054 = vmul.f32 %v1022, %v1022
      %v1055 = vmul.f32 %v1023, %v1023
      %v1056 = vmul.f32 %v1024, %v1024
      %v1057 = vmul.f32 %v1025, %v1025
      %v1058 = vmul.f32 %v1026, %v1026
      %v1059 = vmul.f32 %v1027, %v1027
      %v1060 = vmul.f32 %v1028, %v1028
      %v1061 = vmul.f32 %v1029, %v1029
      %v1062 = vmul.f32 %v1030, %v1030
      %v1063 = vmul.f32 %v1031, %v1031
      %v1064 = vmul.f32 %v1032, %v1032
      %v1065 = vmul.f32 %v1033, %v1033
      %v1066 = vmul.f32 %v1034, %v1034
      %v1067 = vmul.f32 %v1035, %v1035
      %v1068 = vmul.f32 %v1036, %v1036
      %v1069 = vmul.f32 %v1053, %v494
      %v1070 = vmul.f32 %v1054, %v496
      %v1071 = vmul.f32 %v1055, %v498
      %v1072 = vmul.f32 %v1056, %v500
      %v1073 = vmul.f32 %v1057, %v502
      %v1074 = vmul.f32 %v1058, %v504
      %v1075 = vmul.f32 %v1059, %v506
      %v1076 = vmul.f32 %v1060, %v508
      %v1077 = vmul.f32 %v1061, %v510
      %v1078 = vmul.f32 %v1062, %v512
      %v1079 = vmul.f32 %v1063, %v514
      %v1080 = vmul.f32 %v1064, %v516
      %v1081 = vmul.f32 %v1065, %v518
      %v1082 = vmul.f32 %v1066, %v520
      %v1083 = vmul.f32 %v1067, %v522
      %v1084 = vmul.f32 %v1068, %v524
      %v1086 = vlaneseq
      %v1087 = vshrl.u32 %v1086, 7
      %v1088 = vsub.s32 0, %v1087
      %v1089 = vrot.slane %v234, %v1088
      %v1091 = vmul.f32 %v399, %v1089
      %v1092 = vmul.f32 %v404, %v1089
      %v1093 = vmul.f32 %v409, %v1089
      %v1094 = vmul.f32 %v414, %v1089
      %v1095 = vmul.f32 %v419, %v1089
      %v1096 = vmul.f32 %v424, %v1089
      %v1097 = vmul.f32 %v429, %v1089
      %v1098 = vmul.f32 %v434, %v1089
      %v1099 = vmul.f32 %v439, %v1089
      %v1100 = vmul.f32 %v444, %v1089
      %v1101 = vmul.f32 %v449, %v1089
      %v1102 = vmul.f32 %v454, %v1089
      %v1103 = vmul.f32 %v459, %v1089
      %v1104 = vmul.f32 %v464, %v1089
      %v1105 = vmul.f32 %v469, %v1089
      %v1106 = vmul.f32 %v474, %v1089
      %1107 = vadd.xlane.f32.xlu0 %v1091
      %v1108 = vpop.xlane.xlu0 %1107
      %1109 = vadd.xlane.f32.xlu0 %v1092
      %v1110 = vpop.xlane.xlu0 %1109
      %1111 = vadd.xlane.f32.xlu0 %v1093
      %v1112 = vpop.xlane.xlu0 %1111
      %1113 = vadd.xlane.f32.xlu0 %v1094
      %v1114 = vpop.xlane.xlu0 %1113
      %1115 = vadd.xlane.f32.xlu0 %v1095
      %v1116 = vpop.xlane.xlu0 %1115
      %1117 = vadd.xlane.f32.xlu0 %v1096
      %v1118 = vpop.xlane.xlu0 %1117
      %1119 = vadd.xlane.f32.xlu0 %v1097
      %v1120 = vpop.xlane.xlu0 %1119
      %1121 = vadd.xlane.f32.xlu0 %v1098
      %v1122 = vpop.xlane.xlu0 %1121
      %1123 = vadd.xlane.f32.xlu0 %v1099
      %v1124 = vpop.xlane.xlu0 %1123
      %1125 = vadd.xlane.f32.xlu0 %v1100
      %v1126 = vpop.xlane.xlu0 %1125
      %1127 = vadd.xlane.f32.xlu0 %v1101
      %v1128 = vpop.xlane.xlu0 %1127
      %1129 = vadd.xlane.f32.xlu0 %v1102
      %v1130 = vpop.xlane.xlu0 %1129
      %1131 = vadd.xlane.f32.xlu0 %v1103
      %v1132 = vpop.xlane.xlu0 %1131
      %1133 = vadd.xlane.f32.xlu0 %v1104
      %v1134 = vpop.xlane.xlu0 %1133
      %1135 = vadd.xlane.f32.xlu0 %v1105
      %v1136 = vpop.xlane.xlu0 %1135
      %1137 = vadd.xlane.f32.xlu0 %v1106
      %v1138 = vpop.xlane.xlu0 %1137
      %v1139 = vmul.f32 %v1021, %v1108
      %v1140 = vmul.f32 %v1022, %v1110
      %v1141 = vmul.f32 %v1023, %v1112
      %v1142 = vmul.f32 %v1024, %v1114
      %v1143 = vmul.f32 %v1025, %v1116
      %v1144 = vmul.f32 %v1026, %v1118
      %v1145 = vmul.f32 %v1027, %v1120
      %v1146 = vmul.f32 %v1028, %v1122
      %v1147 = vmul.f32 %v1029, %v1124
      %v1148 = vmul.f32 %v1030, %v1126
      %v1149 = vmul.f32 %v1031, %v1128
      %v1150 = vmul.f32 %v1032, %v1130
      %v1151 = vmul.f32 %v1033, %v1132
      %v1152 = vmul.f32 %v1034, %v1134
      %v1153 = vmul.f32 %v1035, %v1136
      %v1154 = vmul.f32 %v1036, %v1138
      %v1155 = vmul.f32 %v1139, 2.0
      %v1156 = vmul.f32 %v1140, 2.0
      %v1157 = vmul.f32 %v1141, 2.0
      %v1158 = vmul.f32 %v1142, 2.0
      %v1159 = vmul.f32 %v1143, 2.0
      %v1160 = vmul.f32 %v1144, 2.0
      %v1161 = vmul.f32 %v1145, 2.0
      %v1162 = vmul.f32 %v1146, 2.0
      %v1163 = vmul.f32 %v1147, 2.0
      %v1164 = vmul.f32 %v1148, 2.0
      %v1165 = vmul.f32 %v1149, 2.0
      %v1166 = vmul.f32 %v1150, 2.0
      %v1167 = vmul.f32 %v1151, 2.0
      %v1168 = vmul.f32 %v1152, 2.0
      %v1169 = vmul.f32 %v1153, 2.0
      %v1170 = vmul.f32 %v1154, 2.0
      %v1171 = vadd.f32 %v1155, 1.0
      %v1172 = vadd.f32 %v1156, 1.0
      %v1173 = vadd.f32 %v1157, 1.0
      %v1174 = vadd.f32 %v1158, 1.0
      %v1175 = vadd.f32 %v1159, 1.0
      %v1176 = vadd.f32 %v1160, 1.0
      %v1177 = vadd.f32 %v1161, 1.0
      %v1178 = vadd.f32 %v1162, 1.0
      %v1179 = vadd.f32 %v1163, 1.0
      %v1180 = vadd.f32 %v1164, 1.0
      %v1181 = vadd.f32 %v1165, 1.0
      %v1182 = vadd.f32 %v1166, 1.0
      %v1183 = vadd.f32 %v1167, 1.0
      %v1184 = vadd.f32 %v1168, 1.0
      %v1185 = vadd.f32 %v1169, 1.0
      %v1186 = vadd.f32 %v1170, 1.0
      %v1187 = vstv %s235
      %v1188 = vadd.f32 %v1171, %v1187
      %v1189 = vadd.f32 %v1172, %v1187
      %v1190 = vadd.f32 %v1173, %v1187
      %v1191 = vadd.f32 %v1174, %v1187
      %v1192 = vadd.f32 %v1175, %v1187
      %v1193 = vadd.f32 %v1176, %v1187
      %v1194 = vadd.f32 %v1177, %v1187
      %v1195 = vadd.f32 %v1178, %v1187
      %v1196 = vadd.f32 %v1179, %v1187
      %v1197 = vadd.f32 %v1180, %v1187
      %v1198 = vadd.f32 %v1181, %v1187
      %v1199 = vadd.f32 %v1182, %v1187
      %v1200 = vadd.f32 %v1183, %v1187
      %v1201 = vadd.f32 %v1184, %v1187
      %v1202 = vadd.f32 %v1185, %v1187
      %v1203 = vadd.f32 %v1186, %v1187
      %v1204 = vmul.f32 %v1188, %v1037
      %v1205 = vmul.f32 %v1189, %v1038
      %v1206 = vmul.f32 %v1190, %v1039
      %v1207 = vmul.f32 %v1191, %v1040
      %v1208 = vmul.f32 %v1192, %v1041
      %v1209 = vmul.f32 %v1193, %v1042
      %v1210 = vmul.f32 %v1194, %v1043
      %v1211 = vmul.f32 %v1195, %v1044
      %v1212 = vmul.f32 %v1196, %v1045
      %v1213 = vmul.f32 %v1197, %v1046
      %v1214 = vmul.f32 %v1198, %v1047
      %v1215 = vmul.f32 %v1199, %v1048
      %v1216 = vmul.f32 %v1200, %v1049
      %v1217 = vmul.f32 %v1201, %v1050
      %v1218 = vmul.f32 %v1202, %v1051
      %v1219 = vmul.f32 %v1203, %v1052
      %v1220 = vsub.f32 1.0, %v1069
      %v1221 = vsub.f32 1.0, %v1070
      %v1222 = vsub.f32 1.0, %v1071
      %v1223 = vsub.f32 1.0, %v1072
      %v1224 = vsub.f32 1.0, %v1073
      %v1225 = vsub.f32 1.0, %v1074
      %v1226 = vsub.f32 1.0, %v1075
      %v1227 = vsub.f32 1.0, %v1076
      %v1228 = vsub.f32 1.0, %v1077
      %v1229 = vsub.f32 1.0, %v1078
      %v1230 = vsub.f32 1.0, %v1079
      %v1231 = vsub.f32 1.0, %v1080
      %v1232 = vsub.f32 1.0, %v1081
      %v1233 = vsub.f32 1.0, %v1082
      %v1234 = vsub.f32 1.0, %v1083
      %v1235 = vsub.f32 1.0, %v1084
      %v1236 = vmul.f32 %v1220, %v1089
      %v1237 = vmul.f32 %v1221, %v1089
      %v1238 = vmul.f32 %v1222, %v1089
      %v1239 = vmul.f32 %v1223, %v1089
      %v1240 = vmul.f32 %v1224, %v1089
      %v1241 = vmul.f32 %v1225, %v1089
      %v1242 = vmul.f32 %v1226, %v1089
      %v1243 = vmul.f32 %v1227, %v1089
      %v1244 = vmul.f32 %v1228, %v1089
      %v1245 = vmul.f32 %v1229, %v1089
      %v1246 = vmul.f32 %v1230, %v1089
      %v1247 = vmul.f32 %v1231, %v1089
      %v1248 = vmul.f32 %v1232, %v1089
      %v1249 = vmul.f32 %v1233, %v1089
      %v1250 = vmul.f32 %v1234, %v1089
      %v1251 = vmul.f32 %v1235, %v1089
      %v1252 = vadd.f32 %v1204, %v1236
      %v1253 = vadd.f32 %v1205, %v1237
      %v1254 = vadd.f32 %v1206, %v1238
      %v1255 = vadd.f32 %v1207, %v1239
      %v1256 = vadd.f32 %v1208, %v1240
      %v1257 = vadd.f32 %v1209, %v1241
      %v1258 = vadd.f32 %v1210, %v1242
      %v1259 = vadd.f32 %v1211, %v1243
      %v1260 = vadd.f32 %v1212, %v1244
      %v1261 = vadd.f32 %v1213, %v1245
      %v1262 = vadd.f32 %v1214, %v1246
      %v1263 = vadd.f32 %v1215, %v1247
      %v1264 = vadd.f32 %v1216, %v1248
      %v1265 = vadd.f32 %v1217, %v1249
      %v1266 = vadd.f32 %v1218, %v1250
      %v1267 = vadd.f32 %v1219, %v1251
      %v1268 = vmul.f32 %v1187, %v1069
      %v1269 = vmul.f32 %v1187, %v1070
      %v1270 = vmul.f32 %v1187, %v1071
      %v1271 = vmul.f32 %v1187, %v1072
      %v1272 = vmul.f32 %v1187, %v1073
      %v1273 = vmul.f32 %v1187, %v1074
      %v1274 = vmul.f32 %v1187, %v1075
      %v1275 = vmul.f32 %v1187, %v1076
      %v1276 = vmul.f32 %v1187, %v1077
      %v1277 = vmul.f32 %v1187, %v1078
      %v1278 = vmul.f32 %v1187, %v1079
      %v1279 = vmul.f32 %v1187, %v1080
      %v1280 = vmul.f32 %v1187, %v1081
      %v1281 = vmul.f32 %v1187, %v1082
      %v1282 = vmul.f32 %v1187, %v1083
      %v1283 = vmul.f32 %v1187, %v1084
      %v1284 = vadd.f32 %v1171, %v1268
      %v1285 = vadd.f32 %v1172, %v1269
      %v1286 = vadd.f32 %v1173, %v1270
      %v1287 = vadd.f32 %v1174, %v1271
      %v1288 = vadd.f32 %v1175, %v1272
      %v1289 = vadd.f32 %v1176, %v1273
      %v1290 = vadd.f32 %v1177, %v1274
      %v1291 = vadd.f32 %v1178, %v1275
      %v1292 = vadd.f32 %v1179, %v1276
      %v1293 = vadd.f32 %v1180, %v1277
      %v1294 = vadd.f32 %v1181, %v1278
      %v1295 = vadd.f32 %v1182, %v1279
      %v1296 = vadd.f32 %v1183, %v1280
      %v1297 = vadd.f32 %v1184, %v1281
      %v1298 = vadd.f32 %v1185, %v1282
      %v1299 = vadd.f32 %v1186, %v1283
      %v1300 = vmax.f32 %v1284, 1e-15
      %v1301 = vmax.f32 %v1285, 1e-15
      %v1302 = vmax.f32 %v1286, 1e-15
      %v1303 = vmax.f32 %v1287, 1e-15
      %v1304 = vmax.f32 %v1288, 1e-15
      %v1305 = vmax.f32 %v1289, 1e-15
      %v1306 = vmax.f32 %v1290, 1e-15
      %v1307 = vmax.f32 %v1291, 1e-15
      %v1308 = vmax.f32 %v1292, 1e-15
      %v1309 = vmax.f32 %v1293, 1e-15
      %v1310 = vmax.f32 %v1294, 1e-15
      %v1311 = vmax.f32 %v1295, 1e-15
      %v1312 = vmax.f32 %v1296, 1e-15
      %v1313 = vmax.f32 %v1297, 1e-15
      %v1314 = vmax.f32 %v1298, 1e-15
      %v1315 = vmax.f32 %v1299, 1e-15
      %v1316 = vrcp.pop %v1300
      %v1317 = vmul.f32 1.0, %v1316
      %v1318 = vrcp.pop %v1301
      %v1319 = vmul.f32 1.0, %v1318
      %v1320 = vrcp.pop %v1302
      %v1321 = vmul.f32 1.0, %v1320
      %v1322 = vrcp.pop %v1303
      %v1323 = vmul.f32 1.0, %v1322
      %v1324 = vrcp.pop %v1304
      %v1325 = vmul.f32 1.0, %v1324
      %v1326 = vrcp.pop %v1305
      %v1327 = vmul.f32 1.0, %v1326
      %v1328 = vrcp.pop %v1306
      %v1329 = vmul.f32 1.0, %v1328
      %v1330 = vrcp.pop %v1307
      %v1331 = vmul.f32 1.0, %v1330
      %v1332 = vrcp.pop %v1308
      %v1333 = vmul.f32 1.0, %v1332
      %v1334 = vrcp.pop %v1309
      %v1335 = vmul.f32 1.0, %v1334
      %v1336 = vrcp.pop %v1310
      %v1337 = vmul.f32 1.0, %v1336
      %v1338 = vrcp.pop %v1311
      %v1339 = vmul.f32 1.0, %v1338
      %v1340 = vrcp.pop %v1312
      %v1341 = vmul.f32 1.0, %v1340
      %v1342 = vrcp.pop %v1313
      %v1343 = vmul.f32 1.0, %v1342
      %v1344 = vrcp.pop %v1314
      %v1345 = vmul.f32 1.0, %v1344
      %v1346 = vrcp.pop %v1315
      %v1347 = vmul.f32 1.0, %v1346
      %v1348 = vmul.f32 %v1252, %v1317
      %v1349 = vmul.f32 %v1253, %v1319
      %v1350 = vmul.f32 %v1254, %v1321
      %v1351 = vmul.f32 %v1255, %v1323
      %v1352 = vmul.f32 %v1256, %v1325
      %v1353 = vmul.f32 %v1257, %v1327
      %v1354 = vmul.f32 %v1258, %v1329
      %v1355 = vmul.f32 %v1259, %v1331
      %v1356 = vmul.f32 %v1260, %v1333
      %v1357 = vmul.f32 %v1261, %v1335
      %v1358 = vmul.f32 %v1262, %v1337
      %v1359 = vmul.f32 %v1263, %v1339
      %v1360 = vmul.f32 %v1264, %v1341
      %v1361 = vmul.f32 %v1265, %v1343
      %v1362 = vmul.f32 %v1266, %v1345
      %v1363 = vmul.f32 %v1267, %v1347
      %v1364 = vmul.f32 %v1348, %v1348
      %v1365 = vmul.f32 %v1349, %v1349
      %v1366 = vmul.f32 %v1350, %v1350
      %v1367 = vmul.f32 %v1351, %v1351
      %v1368 = vmul.f32 %v1352, %v1352
      %v1369 = vmul.f32 %v1353, %v1353
      %v1370 = vmul.f32 %v1354, %v1354
      %v1371 = vmul.f32 %v1355, %v1355
      %v1372 = vmul.f32 %v1356, %v1356
      %v1373 = vmul.f32 %v1357, %v1357
      %v1374 = vmul.f32 %v1358, %v1358
      %v1375 = vmul.f32 %v1359, %v1359
      %v1376 = vmul.f32 %v1360, %v1360
      %v1377 = vmul.f32 %v1361, %v1361
      %v1378 = vmul.f32 %v1362, %v1362
      %v1379 = vmul.f32 %v1363, %v1363
      %1380 = vadd.xlane.f32.xlu0 %v1364
      %v1381 = vpop.xlane.xlu0 %1380
      %1382 = vadd.xlane.f32.xlu0 %v1365
      %v1383 = vpop.xlane.xlu0 %1382
      %1384 = vadd.xlane.f32.xlu0 %v1366
      %v1385 = vpop.xlane.xlu0 %1384
      %1386 = vadd.xlane.f32.xlu0 %v1367
      %v1387 = vpop.xlane.xlu0 %1386
      %1388 = vadd.xlane.f32.xlu0 %v1368
      %v1389 = vpop.xlane.xlu0 %1388
      %1390 = vadd.xlane.f32.xlu0 %v1369
      %v1391 = vpop.xlane.xlu0 %1390
      %1392 = vadd.xlane.f32.xlu0 %v1370
      %v1393 = vpop.xlane.xlu0 %1392
      %1394 = vadd.xlane.f32.xlu0 %v1371
      %v1395 = vpop.xlane.xlu0 %1394
      %1396 = vadd.xlane.f32.xlu0 %v1372
      %v1397 = vpop.xlane.xlu0 %1396
      %1398 = vadd.xlane.f32.xlu0 %v1373
      %v1399 = vpop.xlane.xlu0 %1398
      %1400 = vadd.xlane.f32.xlu0 %v1374
      %v1401 = vpop.xlane.xlu0 %1400
      %1402 = vadd.xlane.f32.xlu0 %v1375
      %v1403 = vpop.xlane.xlu0 %1402
      %1404 = vadd.xlane.f32.xlu0 %v1376
      %v1405 = vpop.xlane.xlu0 %1404
      %1406 = vadd.xlane.f32.xlu0 %v1377
      %v1407 = vpop.xlane.xlu0 %1406
      %1408 = vadd.xlane.f32.xlu0 %v1378
      %v1409 = vpop.xlane.xlu0 %1408
      %1410 = vadd.xlane.f32.xlu0 %v1379
      %v1411 = vpop.xlane.xlu0 %1410
      %v1412 = vmax.f32 %v1381, 1e-30
      %v1413 = vmax.f32 %v1383, 1e-30
      %v1414 = vmax.f32 %v1385, 1e-30
      %v1415 = vmax.f32 %v1387, 1e-30
      %v1416 = vmax.f32 %v1389, 1e-30
      %v1417 = vmax.f32 %v1391, 1e-30
      %v1418 = vmax.f32 %v1393, 1e-30
      %v1419 = vmax.f32 %v1395, 1e-30
      %v1420 = vmax.f32 %v1397, 1e-30
      %v1421 = vmax.f32 %v1399, 1e-30
      %v1422 = vmax.f32 %v1401, 1e-30
      %v1423 = vmax.f32 %v1403, 1e-30
      %v1424 = vmax.f32 %v1405, 1e-30
      %v1425 = vmax.f32 %v1407, 1e-30
      %v1426 = vmax.f32 %v1409, 1e-30
      %v1427 = vmax.f32 %v1411, 1e-30
      %v1428 = vrsqrt.pop %v1412
      %v1429 = vrsqrt.pop %v1413
      %v1430 = vrsqrt.pop %v1414
      %v1431 = vrsqrt.pop %v1415
      %v1432 = vrsqrt.pop %v1416
      %v1433 = vrsqrt.pop %v1417
      %v1434 = vrsqrt.pop %v1418
      %v1435 = vrsqrt.pop %v1419
      %v1436 = vrsqrt.pop %v1420
      %v1437 = vrsqrt.pop %v1421
      %v1438 = vrsqrt.pop %v1422
      %v1439 = vrsqrt.pop %v1423
      %v1440 = vrsqrt.pop %v1424
      %v1441 = vrsqrt.pop %v1425
      %v1442 = vrsqrt.pop %v1426
      %v1443 = vrsqrt.pop %v1427
      %v1444 = vmul.f32 %v1381, %v1428
      %v1445 = vmul.f32 %v1383, %v1429
      %v1446 = vmul.f32 %v1385, %v1430
      %v1447 = vmul.f32 %v1387, %v1431
      %v1448 = vmul.f32 %v1389, %v1432
      %v1449 = vmul.f32 %v1391, %v1433
      %v1450 = vmul.f32 %v1393, %v1434
      %v1451 = vmul.f32 %v1395, %v1435
      %v1452 = vmul.f32 %v1397, %v1436
      %v1453 = vmul.f32 %v1399, %v1437
      %v1454 = vmul.f32 %v1401, %v1438
      %v1455 = vmul.f32 %v1403, %v1439
      %v1456 = vmul.f32 %v1405, %v1440
      %v1457 = vmul.f32 %v1407, %v1441
      %v1458 = vmul.f32 %v1409, %v1442
      %v1459 = vmul.f32 %v1411, %v1443
      %vm1460 = vcmp.gt.f32.partialorder %v1444, 0.996
      %vm1461 = vcmp.gt.f32.partialorder %v1445, 0.996
      %vm1462 = vcmp.gt.f32.partialorder %v1446, 0.996
      %vm1463 = vcmp.gt.f32.partialorder %v1447, 0.996
      %vm1464 = vcmp.gt.f32.partialorder %v1448, 0.996
      %vm1465 = vcmp.gt.f32.partialorder %v1449, 0.996
      %vm1466 = vcmp.gt.f32.partialorder %v1450, 0.996
      %vm1467 = vcmp.gt.f32.partialorder %v1451, 0.996
      %vm1468 = vcmp.gt.f32.partialorder %v1452, 0.996
      %vm1469 = vcmp.gt.f32.partialorder %v1453, 0.996
      %vm1470 = vcmp.gt.f32.partialorder %v1454, 0.996
      %vm1471 = vcmp.gt.f32.partialorder %v1455, 0.996
      %vm1472 = vcmp.gt.f32.partialorder %v1456, 0.996
      %vm1473 = vcmp.gt.f32.partialorder %v1457, 0.996
      %vm1474 = vcmp.gt.f32.partialorder %v1458, 0.996
      %vm1475 = vcmp.gt.f32.partialorder %v1459, 0.996
      %v1476 = vmul.f32 %v1428, 0.996
      %v1477 = vmul.f32 %v1429, 0.996
      %v1478 = vmul.f32 %v1430, 0.996
      %v1479 = vmul.f32 %v1431, 0.996
      %v1480 = vmul.f32 %v1432, 0.996
      %v1481 = vmul.f32 %v1433, 0.996
      %v1482 = vmul.f32 %v1434, 0.996
      %v1483 = vmul.f32 %v1435, 0.996
      %v1484 = vmul.f32 %v1436, 0.996
      %v1485 = vmul.f32 %v1437, 0.996
      %v1486 = vmul.f32 %v1438, 0.996
      %v1487 = vmul.f32 %v1439, 0.996
      %v1488 = vmul.f32 %v1440, 0.996
      %v1489 = vmul.f32 %v1441, 0.996
      %v1490 = vmul.f32 %v1442, 0.996
      %v1491 = vmul.f32 %v1443, 0.996
      %v1492 = vsel %vm1460, %v1476, 1.0
      %v1493 = vsel %vm1461, %v1477, 1.0
      %v1494 = vsel %vm1462, %v1478, 1.0
      %v1495 = vsel %vm1463, %v1479, 1.0
      %v1496 = vsel %vm1464, %v1480, 1.0
      %v1497 = vsel %vm1465, %v1481, 1.0
      %v1498 = vsel %vm1466, %v1482, 1.0
      %v1499 = vsel %vm1467, %v1483, 1.0
      %v1500 = vsel %vm1468, %v1484, 1.0
      %v1501 = vsel %vm1469, %v1485, 1.0
      %v1502 = vsel %vm1470, %v1486, 1.0
      %v1503 = vsel %vm1471, %v1487, 1.0
      %v1504 = vsel %vm1472, %v1488, 1.0
      %v1505 = vsel %vm1473, %v1489, 1.0
      %v1506 = vsel %vm1474, %v1490, 1.0
      %v1507 = vsel %vm1475, %v1491, 1.0
      %v1508 = vsel %vm1460, 0.996, %v1444
      %v1509 = vsel %vm1461, 0.996, %v1445
      %v1510 = vsel %vm1462, 0.996, %v1446
      %v1511 = vsel %vm1463, 0.996, %v1447
      %v1512 = vsel %vm1464, 0.996, %v1448
      %v1513 = vsel %vm1465, 0.996, %v1449
      %v1514 = vsel %vm1466, 0.996, %v1450
      %v1515 = vsel %vm1467, 0.996, %v1451
      %v1516 = vsel %vm1468, 0.996, %v1452
      %v1517 = vsel %vm1469, 0.996, %v1453
      %v1518 = vsel %vm1470, 0.996, %v1454
      %v1519 = vsel %vm1471, 0.996, %v1455
      %v1520 = vsel %vm1472, 0.996, %v1456
      %v1521 = vsel %vm1473, 0.996, %v1457
      %v1522 = vsel %vm1474, 0.996, %v1458
      %v1523 = vsel %vm1475, 0.996, %v1459
      %v1524 = vsel %vm1460, 1.004016, %v1428
      %v1525 = vsel %vm1461, 1.004016, %v1429
      %v1526 = vsel %vm1462, 1.004016, %v1430
      %v1527 = vsel %vm1463, 1.004016, %v1431
      %v1528 = vsel %vm1464, 1.004016, %v1432
      %v1529 = vsel %vm1465, 1.004016, %v1433
      %v1530 = vsel %vm1466, 1.004016, %v1434
      %v1531 = vsel %vm1467, 1.004016, %v1435
      %v1532 = vsel %vm1468, 1.004016, %v1436
      %v1533 = vsel %vm1469, 1.004016, %v1437
      %v1534 = vsel %vm1470, 1.004016, %v1438
      %v1535 = vsel %vm1471, 1.004016, %v1439
      %v1536 = vsel %vm1472, 1.004016, %v1440
      %v1537 = vsel %vm1473, 1.004016, %v1441
      %v1538 = vsel %vm1474, 1.004016, %v1442
      %v1539 = vsel %vm1475, 1.004016, %v1443
      %v1540 = vmax.f32 %v1508, -0.9999999
      %v1541 = vmax.f32 %v1509, -0.9999999
      %v1542 = vmax.f32 %v1510, -0.9999999
      %v1543 = vmax.f32 %v1511, -0.9999999
      %v1544 = vmax.f32 %v1512, -0.9999999
      %v1545 = vmax.f32 %v1513, -0.9999999
      %v1546 = vmax.f32 %v1514, -0.9999999
      %v1547 = vmax.f32 %v1515, -0.9999999
      %v1548 = vmax.f32 %v1516, -0.9999999
      %v1549 = vmax.f32 %v1517, -0.9999999
      %v1550 = vmax.f32 %v1518, -0.9999999
      %v1551 = vmax.f32 %v1519, -0.9999999
      %v1552 = vmax.f32 %v1520, -0.9999999
      %v1553 = vmax.f32 %v1521, -0.9999999
      %v1554 = vmax.f32 %v1522, -0.9999999
      %v1555 = vmax.f32 %v1523, -0.9999999
      %v1556 = vmin.f32 %v1540, 0.9999999
      %v1557 = vmin.f32 %v1541, 0.9999999
      %v1558 = vmin.f32 %v1542, 0.9999999
      %v1559 = vmin.f32 %v1543, 0.9999999
      %v1560 = vmin.f32 %v1544, 0.9999999
      %v1561 = vmin.f32 %v1545, 0.9999999
      %v1562 = vmin.f32 %v1546, 0.9999999
      %v1563 = vmin.f32 %v1547, 0.9999999
      %v1564 = vmin.f32 %v1548, 0.9999999
      %v1565 = vmin.f32 %v1549, 0.9999999
      %v1566 = vmin.f32 %v1550, 0.9999999
      %v1567 = vmin.f32 %v1551, 0.9999999
      %v1568 = vmin.f32 %v1552, 0.9999999
      %v1569 = vmin.f32 %v1553, 0.9999999
      %v1570 = vmin.f32 %v1554, 0.9999999
      %v1571 = vmin.f32 %v1555, 0.9999999
      %v1572 = vadd.f32 %v1556, 1.0
      %v1573 = vlog2.pop %v1572
      %v1574 = vmul.f32 %v1573, 0.6931472
      %v1575 = vmul.f32 -0.5, %v1556
      %v1576 = vadd.f32 %v1575, 1.0
      %v1577 = vmul.f32 %v1576, %v1556
      %v1578 = vand.u32 2147483647, %v1556
      %vm1579 = vcmp.lt.f32.partialorder %v1578, 0.0004427343
      %v1580 = vsel %vm1579, %v1577, %v1574
      %v1581 = vadd.f32 %v1557, 1.0
      %v1582 = vlog2.pop %v1581
      %v1583 = vmul.f32 %v1582, 0.6931472
      %v1584 = vmul.f32 -0.5, %v1557
      %v1585 = vadd.f32 %v1584, 1.0
      %v1586 = vmul.f32 %v1585, %v1557
      %v1587 = vand.u32 2147483647, %v1557
      %vm1588 = vcmp.lt.f32.partialorder %v1587, 0.0004427343
      %v1589 = vsel %vm1588, %v1586, %v1583
      %v1590 = vadd.f32 %v1558, 1.0
      %v1591 = vlog2.pop %v1590
      %v1592 = vmul.f32 %v1591, 0.6931472
      %v1593 = vmul.f32 -0.5, %v1558
      %v1594 = vadd.f32 %v1593, 1.0
      %v1595 = vmul.f32 %v1594, %v1558
      %v1596 = vand.u32 2147483647, %v1558
      %vm1597 = vcmp.lt.f32.partialorder %v1596, 0.0004427343
      %v1598 = vsel %vm1597, %v1595, %v1592
      %v1599 = vadd.f32 %v1559, 1.0
      %v1600 = vlog2.pop %v1599
      %v1601 = vmul.f32 %v1600, 0.6931472
      %v1602 = vmul.f32 -0.5, %v1559
      %v1603 = vadd.f32 %v1602, 1.0
      %v1604 = vmul.f32 %v1603, %v1559
      %v1605 = vand.u32 2147483647, %v1559
      %vm1606 = vcmp.lt.f32.partialorder %v1605, 0.0004427343
      %v1607 = vsel %vm1606, %v1604, %v1601
      %v1608 = vadd.f32 %v1560, 1.0
      %v1609 = vlog2.pop %v1608
      %v1610 = vmul.f32 %v1609, 0.6931472
      %v1611 = vmul.f32 -0.5, %v1560
      %v1612 = vadd.f32 %v1611, 1.0
      %v1613 = vmul.f32 %v1612, %v1560
      %v1614 = vand.u32 2147483647, %v1560
      %vm1615 = vcmp.lt.f32.partialorder %v1614, 0.0004427343
      %v1616 = vsel %vm1615, %v1613, %v1610
      %v1617 = vadd.f32 %v1561, 1.0
      %v1618 = vlog2.pop %v1617
      %v1619 = vmul.f32 %v1618, 0.6931472
      %v1620 = vmul.f32 -0.5, %v1561
      %v1621 = vadd.f32 %v1620, 1.0
      %v1622 = vmul.f32 %v1621, %v1561
      %v1623 = vand.u32 2147483647, %v1561
      %vm1624 = vcmp.lt.f32.partialorder %v1623, 0.0004427343
      %v1625 = vsel %vm1624, %v1622, %v1619
      %v1626 = vadd.f32 %v1562, 1.0
      %v1627 = vlog2.pop %v1626
      %v1628 = vmul.f32 %v1627, 0.6931472
      %v1629 = vmul.f32 -0.5, %v1562
      %v1630 = vadd.f32 %v1629, 1.0
      %v1631 = vmul.f32 %v1630, %v1562
      %v1632 = vand.u32 2147483647, %v1562
      %vm1633 = vcmp.lt.f32.partialorder %v1632, 0.0004427343
      %v1634 = vsel %vm1633, %v1631, %v1628
      %v1635 = vadd.f32 %v1563, 1.0
      %v1636 = vlog2.pop %v1635
      %v1637 = vmul.f32 %v1636, 0.6931472
      %v1638 = vmul.f32 -0.5, %v1563
      %v1639 = vadd.f32 %v1638, 1.0
      %v1640 = vmul.f32 %v1639, %v1563
      %v1641 = vand.u32 2147483647, %v1563
      %vm1642 = vcmp.lt.f32.partialorder %v1641, 0.0004427343
      %v1643 = vsel %vm1642, %v1640, %v1637
      %v1644 = vadd.f32 %v1564, 1.0
      %v1645 = vlog2.pop %v1644
      %v1646 = vmul.f32 %v1645, 0.6931472
      %v1647 = vmul.f32 -0.5, %v1564
      %v1648 = vadd.f32 %v1647, 1.0
      %v1649 = vmul.f32 %v1648, %v1564
      %v1650 = vand.u32 2147483647, %v1564
      %vm1651 = vcmp.lt.f32.partialorder %v1650, 0.0004427343
      %v1652 = vsel %vm1651, %v1649, %v1646
      %v1653 = vadd.f32 %v1565, 1.0
      %v1654 = vlog2.pop %v1653
      %v1655 = vmul.f32 %v1654, 0.6931472
      %v1656 = vmul.f32 -0.5, %v1565
      %v1657 = vadd.f32 %v1656, 1.0
      %v1658 = vmul.f32 %v1657, %v1565
      %v1659 = vand.u32 2147483647, %v1565
      %vm1660 = vcmp.lt.f32.partialorder %v1659, 0.0004427343
      %v1661 = vsel %vm1660, %v1658, %v1655
      %v1662 = vadd.f32 %v1566, 1.0
      %v1663 = vlog2.pop %v1662
      %v1664 = vmul.f32 %v1663, 0.6931472
      %v1665 = vmul.f32 -0.5, %v1566
      %v1666 = vadd.f32 %v1665, 1.0
      %v1667 = vmul.f32 %v1666, %v1566
      %v1668 = vand.u32 2147483647, %v1566
      %vm1669 = vcmp.lt.f32.partialorder %v1668, 0.0004427343
      %v1670 = vsel %vm1669, %v1667, %v1664
      %v1671 = vadd.f32 %v1567, 1.0
      %v1672 = vlog2.pop %v1671
      %v1673 = vmul.f32 %v1672, 0.6931472
      %v1674 = vmul.f32 -0.5, %v1567
      %v1675 = vadd.f32 %v1674, 1.0
      %v1676 = vmul.f32 %v1675, %v1567
      %v1677 = vand.u32 2147483647, %v1567
      %vm1678 = vcmp.lt.f32.partialorder %v1677, 0.0004427343
      %v1679 = vsel %vm1678, %v1676, %v1673
      %v1680 = vadd.f32 %v1568, 1.0
      %v1681 = vlog2.pop %v1680
      %v1682 = vmul.f32 %v1681, 0.6931472
      %v1683 = vmul.f32 -0.5, %v1568
      %v1684 = vadd.f32 %v1683, 1.0
      %v1685 = vmul.f32 %v1684, %v1568
      %v1686 = vand.u32 2147483647, %v1568
      %vm1687 = vcmp.lt.f32.partialorder %v1686, 0.0004427343
      %v1688 = vsel %vm1687, %v1685, %v1682
      %v1689 = vadd.f32 %v1569, 1.0
      %v1690 = vlog2.pop %v1689
      %v1691 = vmul.f32 %v1690, 0.6931472
      %v1692 = vmul.f32 -0.5, %v1569
      %v1693 = vadd.f32 %v1692, 1.0
      %v1694 = vmul.f32 %v1693, %v1569
      %v1695 = vand.u32 2147483647, %v1569
      %vm1696 = vcmp.lt.f32.partialorder %v1695, 0.0004427343
      %v1697 = vsel %vm1696, %v1694, %v1691
      %v1698 = vadd.f32 %v1570, 1.0
      %v1699 = vlog2.pop %v1698
      %v1700 = vmul.f32 %v1699, 0.6931472
      %v1701 = vmul.f32 -0.5, %v1570
      %v1702 = vadd.f32 %v1701, 1.0
      %v1703 = vmul.f32 %v1702, %v1570
      %v1704 = vand.u32 2147483647, %v1570
      %vm1705 = vcmp.lt.f32.partialorder %v1704, 0.0004427343
      %v1706 = vsel %vm1705, %v1703, %v1700
      %v1707 = vadd.f32 %v1571, 1.0
      %v1708 = vlog2.pop %v1707
      %v1709 = vmul.f32 %v1708, 0.6931472
      %v1710 = vmul.f32 -0.5, %v1571
      %v1711 = vadd.f32 %v1710, 1.0
      %v1712 = vmul.f32 %v1711, %v1571
      %v1713 = vand.u32 2147483647, %v1571
      %vm1714 = vcmp.lt.f32.partialorder %v1713, 0.0004427343
      %v1715 = vsel %vm1714, %v1712, %v1709
      %v1716 = vsub.f32 0.0, %v1556
      %v1717 = vsub.f32 0.0, %v1557
      %v1718 = vsub.f32 0.0, %v1558
      %v1719 = vsub.f32 0.0, %v1559
      %v1720 = vsub.f32 0.0, %v1560
      %v1721 = vsub.f32 0.0, %v1561
      %v1722 = vsub.f32 0.0, %v1562
      %v1723 = vsub.f32 0.0, %v1563
      %v1724 = vsub.f32 0.0, %v1564
      %v1725 = vsub.f32 0.0, %v1565
      %v1726 = vsub.f32 0.0, %v1566
      %v1727 = vsub.f32 0.0, %v1567
      %v1728 = vsub.f32 0.0, %v1568
      %v1729 = vsub.f32 0.0, %v1569
      %v1730 = vsub.f32 0.0, %v1570
      %v1731 = vsub.f32 0.0, %v1571
      %v1732 = vadd.f32 %v1716, 1.0
      %v1733 = vlog2.pop %v1732
      %v1734 = vmul.f32 %v1733, 0.6931472
      %v1735 = vmul.f32 -0.5, %v1716
      %v1736 = vadd.f32 %v1735, 1.0
      %v1737 = vmul.f32 %v1736, %v1716
      %v1738 = vand.u32 2147483647, %v1716
      %vm1739 = vcmp.lt.f32.partialorder %v1738, 0.0004427343
      %v1740 = vsel %vm1739, %v1737, %v1734
      %v1741 = vadd.f32 %v1717, 1.0
      %v1742 = vlog2.pop %v1741
      %v1743 = vmul.f32 %v1742, 0.6931472
      %v1744 = vmul.f32 -0.5, %v1717
      %v1745 = vadd.f32 %v1744, 1.0
      %v1746 = vmul.f32 %v1745, %v1717
      %v1747 = vand.u32 2147483647, %v1717
      %vm1748 = vcmp.lt.f32.partialorder %v1747, 0.0004427343
      %v1749 = vsel %vm1748, %v1746, %v1743
      %v1750 = vadd.f32 %v1718, 1.0
      %v1751 = vlog2.pop %v1750
      %v1752 = vmul.f32 %v1751, 0.6931472
      %v1753 = vmul.f32 -0.5, %v1718
      %v1754 = vadd.f32 %v1753, 1.0
      %v1755 = vmul.f32 %v1754, %v1718
      %v1756 = vand.u32 2147483647, %v1718
      %vm1757 = vcmp.lt.f32.partialorder %v1756, 0.0004427343
      %v1758 = vsel %vm1757, %v1755, %v1752
      %v1759 = vadd.f32 %v1719, 1.0
      %v1760 = vlog2.pop %v1759
      %v1761 = vmul.f32 %v1760, 0.6931472
      %v1762 = vmul.f32 -0.5, %v1719
      %v1763 = vadd.f32 %v1762, 1.0
      %v1764 = vmul.f32 %v1763, %v1719
      %v1765 = vand.u32 2147483647, %v1719
      %vm1766 = vcmp.lt.f32.partialorder %v1765, 0.0004427343
      %v1767 = vsel %vm1766, %v1764, %v1761
      %v1768 = vadd.f32 %v1720, 1.0
      %v1769 = vlog2.pop %v1768
      %v1770 = vmul.f32 %v1769, 0.6931472
      %v1771 = vmul.f32 -0.5, %v1720
      %v1772 = vadd.f32 %v1771, 1.0
      %v1773 = vmul.f32 %v1772, %v1720
      %v1774 = vand.u32 2147483647, %v1720
      %vm1775 = vcmp.lt.f32.partialorder %v1774, 0.0004427343
      %v1776 = vsel %vm1775, %v1773, %v1770
      %v1777 = vadd.f32 %v1721, 1.0
      %v1778 = vlog2.pop %v1777
      %v1779 = vmul.f32 %v1778, 0.6931472
      %v1780 = vmul.f32 -0.5, %v1721
      %v1781 = vadd.f32 %v1780, 1.0
      %v1782 = vmul.f32 %v1781, %v1721
      %v1783 = vand.u32 2147483647, %v1721
      %vm1784 = vcmp.lt.f32.partialorder %v1783, 0.0004427343
      %v1785 = vsel %vm1784, %v1782, %v1779
      %v1786 = vadd.f32 %v1722, 1.0
      %v1787 = vlog2.pop %v1786
      %v1788 = vmul.f32 %v1787, 0.6931472
      %v1789 = vmul.f32 -0.5, %v1722
      %v1790 = vadd.f32 %v1789, 1.0
      %v1791 = vmul.f32 %v1790, %v1722
      %v1792 = vand.u32 2147483647, %v1722
      %vm1793 = vcmp.lt.f32.partialorder %v1792, 0.0004427343
      %v1794 = vsel %vm1793, %v1791, %v1788
      %v1795 = vadd.f32 %v1723, 1.0
      %v1796 = vlog2.pop %v1795
      %v1797 = vmul.f32 %v1796, 0.6931472
      %v1798 = vmul.f32 -0.5, %v1723
      %v1799 = vadd.f32 %v1798, 1.0
      %v1800 = vmul.f32 %v1799, %v1723
      %v1801 = vand.u32 2147483647, %v1723
      %vm1802 = vcmp.lt.f32.partialorder %v1801, 0.0004427343
      %v1803 = vsel %vm1802, %v1800, %v1797
      %v1804 = vadd.f32 %v1724, 1.0
      %v1805 = vlog2.pop %v1804
      %v1806 = vmul.f32 %v1805, 0.6931472
      %v1807 = vmul.f32 -0.5, %v1724
      %v1808 = vadd.f32 %v1807, 1.0
      %v1809 = vmul.f32 %v1808, %v1724
      %v1810 = vand.u32 2147483647, %v1724
      %vm1811 = vcmp.lt.f32.partialorder %v1810, 0.0004427343
      %v1812 = vsel %vm1811, %v1809, %v1806
      %v1813 = vadd.f32 %v1725, 1.0
      %v1814 = vlog2.pop %v1813
      %v1815 = vmul.f32 %v1814, 0.6931472
      %v1816 = vmul.f32 -0.5, %v1725
      %v1817 = vadd.f32 %v1816, 1.0
      %v1818 = vmul.f32 %v1817, %v1725
      %v1819 = vand.u32 2147483647, %v1725
      %vm1820 = vcmp.lt.f32.partialorder %v1819, 0.0004427343
      %v1821 = vsel %vm1820, %v1818, %v1815
      %v1822 = vadd.f32 %v1726, 1.0
      %v1823 = vlog2.pop %v1822
      %v1824 = vmul.f32 %v1823, 0.6931472
      %v1825 = vmul.f32 -0.5, %v1726
      %v1826 = vadd.f32 %v1825, 1.0
      %v1827 = vmul.f32 %v1826, %v1726
      %v1828 = vand.u32 2147483647, %v1726
      %vm1829 = vcmp.lt.f32.partialorder %v1828, 0.0004427343
      %v1830 = vsel %vm1829, %v1827, %v1824
      %v1831 = vadd.f32 %v1727, 1.0
      %v1832 = vlog2.pop %v1831
      %v1833 = vmul.f32 %v1832, 0.6931472
      %v1834 = vmul.f32 -0.5, %v1727
      %v1835 = vadd.f32 %v1834, 1.0
      %v1836 = vmul.f32 %v1835, %v1727
      %v1837 = vand.u32 2147483647, %v1727
      %vm1838 = vcmp.lt.f32.partialorder %v1837, 0.0004427343
      %v1839 = vsel %vm1838, %v1836, %v1833
      %v1840 = vadd.f32 %v1728, 1.0
      %v1841 = vlog2.pop %v1840
      %v1842 = vmul.f32 %v1841, 0.6931472
      %v1843 = vmul.f32 -0.5, %v1728
      %v1844 = vadd.f32 %v1843, 1.0
      %v1845 = vmul.f32 %v1844, %v1728
      %v1846 = vand.u32 2147483647, %v1728
      %vm1847 = vcmp.lt.f32.partialorder %v1846, 0.0004427343
      %v1848 = vsel %vm1847, %v1845, %v1842
      %v1849 = vadd.f32 %v1729, 1.0
      %v1850 = vlog2.pop %v1849
      %v1851 = vmul.f32 %v1850, 0.6931472
      %v1852 = vmul.f32 -0.5, %v1729
      %v1853 = vadd.f32 %v1852, 1.0
      %v1854 = vmul.f32 %v1853, %v1729
      %v1855 = vand.u32 2147483647, %v1729
      %vm1856 = vcmp.lt.f32.partialorder %v1855, 0.0004427343
      %v1857 = vsel %vm1856, %v1854, %v1851
      %v1858 = vadd.f32 %v1730, 1.0
      %v1859 = vlog2.pop %v1858
      %v1860 = vmul.f32 %v1859, 0.6931472
      %v1861 = vmul.f32 -0.5, %v1730
      %v1862 = vadd.f32 %v1861, 1.0
      %v1863 = vmul.f32 %v1862, %v1730
      %v1864 = vand.u32 2147483647, %v1730
      %vm1865 = vcmp.lt.f32.partialorder %v1864, 0.0004427343
      %v1866 = vsel %vm1865, %v1863, %v1860
      %v1867 = vadd.f32 %v1731, 1.0
      %v1868 = vlog2.pop %v1867
      %v1869 = vmul.f32 %v1868, 0.6931472
      %v1870 = vmul.f32 -0.5, %v1731
      %v1871 = vadd.f32 %v1870, 1.0
      %v1872 = vmul.f32 %v1871, %v1731
      %v1873 = vand.u32 2147483647, %v1731
      %vm1874 = vcmp.lt.f32.partialorder %v1873, 0.0004427343
      %v1875 = vsel %vm1874, %v1872, %v1869
      %v1876 = vsub.f32 %v1580, %v1740
      %v1877 = vsub.f32 %v1589, %v1749
      %v1878 = vsub.f32 %v1598, %v1758
      %v1879 = vsub.f32 %v1607, %v1767
      %v1880 = vsub.f32 %v1616, %v1776
      %v1881 = vsub.f32 %v1625, %v1785
      %v1882 = vsub.f32 %v1634, %v1794
      %v1883 = vsub.f32 %v1643, %v1803
      %v1884 = vsub.f32 %v1652, %v1812
      %v1885 = vsub.f32 %v1661, %v1821
      %v1886 = vsub.f32 %v1670, %v1830
      %v1887 = vsub.f32 %v1679, %v1839
      %v1888 = vsub.f32 %v1688, %v1848
      %v1889 = vsub.f32 %v1697, %v1857
      %v1890 = vsub.f32 %v1706, %v1866
      %v1891 = vsub.f32 %v1715, %v1875
      %v1892 = vmul.f32 %v1876, 0.5
      %v1893 = vmul.f32 %v1877, 0.5
      %v1894 = vmul.f32 %v1878, 0.5
      %v1895 = vmul.f32 %v1879, 0.5
      %v1896 = vmul.f32 %v1880, 0.5
      %v1897 = vmul.f32 %v1881, 0.5
      %v1898 = vmul.f32 %v1882, 0.5
      %v1899 = vmul.f32 %v1883, 0.5
      %v1900 = vmul.f32 %v1884, 0.5
      %v1901 = vmul.f32 %v1885, 0.5
      %v1902 = vmul.f32 %v1886, 0.5
      %v1903 = vmul.f32 %v1887, 0.5
      %v1904 = vmul.f32 %v1888, 0.5
      %v1905 = vmul.f32 %v1889, 0.5
      %v1906 = vmul.f32 %v1890, 0.5
      %v1907 = vmul.f32 %v1891, 0.5
      %v1908 = vmul.f32 %v1892, %v1524
      %v1909 = vmul.f32 %v1893, %v1525
      %v1910 = vmul.f32 %v1894, %v1526
      %v1911 = vmul.f32 %v1895, %v1527
      %v1912 = vmul.f32 %v1896, %v1528
      %v1913 = vmul.f32 %v1897, %v1529
      %v1914 = vmul.f32 %v1898, %v1530
      %v1915 = vmul.f32 %v1899, %v1531
      %v1916 = vmul.f32 %v1900, %v1532
      %v1917 = vmul.f32 %v1901, %v1533
      %v1918 = vmul.f32 %v1902, %v1534
      %v1919 = vmul.f32 %v1903, %v1535
      %v1920 = vmul.f32 %v1904, %v1536
      %v1921 = vmul.f32 %v1905, %v1537
      %v1922 = vmul.f32 %v1906, %v1538
      %v1923 = vmul.f32 %v1907, %v1539
      %v1924 = vmul.f32 %v1492, %v1908
      %v1925 = vmul.f32 %v1493, %v1909
      %v1926 = vmul.f32 %v1494, %v1910
      %v1927 = vmul.f32 %v1495, %v1911
      %v1928 = vmul.f32 %v1496, %v1912
      %v1929 = vmul.f32 %v1497, %v1913
      %v1930 = vmul.f32 %v1498, %v1914
      %v1931 = vmul.f32 %v1499, %v1915
      %v1932 = vmul.f32 %v1500, %v1916
      %v1933 = vmul.f32 %v1501, %v1917
      %v1934 = vmul.f32 %v1502, %v1918
      %v1935 = vmul.f32 %v1503, %v1919
      %v1936 = vmul.f32 %v1504, %v1920
      %v1937 = vmul.f32 %v1505, %v1921
      %v1938 = vmul.f32 %v1506, %v1922
      %v1939 = vmul.f32 %v1507, %v1923
      %v1940 = vmul.f32 %v1348, %v1924
      %v1941 = vmul.f32 %v1349, %v1925
      %v1942 = vmul.f32 %v1350, %v1926
      %v1943 = vmul.f32 %v1351, %v1927
      %v1944 = vmul.f32 %v1352, %v1928
      %v1945 = vmul.f32 %v1353, %v1929
      %v1946 = vmul.f32 %v1354, %v1930
      %v1947 = vmul.f32 %v1355, %v1931
      %v1948 = vmul.f32 %v1356, %v1932
      %v1949 = vmul.f32 %v1357, %v1933
      %v1950 = vmul.f32 %v1358, %v1934
      %v1951 = vmul.f32 %v1359, %v1935
      %v1952 = vmul.f32 %v1360, %v1936
      %v1953 = vmul.f32 %v1361, %v1937
      %v1954 = vmul.f32 %v1362, %v1938
      %v1955 = vmul.f32 %v1363, %v1939
      %v1956 = vpack.c.bf16 %v1941, %v1940
      %v1957 = vpack.c.bf16 %v1943, %v1942
      %v1958 = vpack.c.bf16 %v1945, %v1944
      %v1959 = vpack.c.bf16 %v1947, %v1946
      %v1960 = vpack.c.bf16 %v1949, %v1948
      %v1961 = vpack.c.bf16 %v1951, %v1950
      %v1962 = vpack.c.bf16 %v1953, %v1952
      %v1963 = vpack.c.bf16 %v1955, %v1954
      %v1972 = vunpack.c.l.b16 %v1956
      %v1973 = vunpack.c.h.b16 %v1956
      %v1974 = vunpack.c.l.b16 %v1957
      %v1975 = vunpack.c.h.b16 %v1957
      %v1976 = vunpack.c.l.b16 %v1958
      %v1977 = vunpack.c.h.b16 %v1958
      %v1978 = vunpack.c.l.b16 %v1959
      %v1979 = vunpack.c.h.b16 %v1959
      %v1980 = vunpack.c.l.b16 %v1960
      %v1981 = vunpack.c.h.b16 %v1960
      %v1982 = vunpack.c.l.b16 %v1961
      %v1983 = vunpack.c.h.b16 %v1961
      %v1984 = vunpack.c.l.b16 %v1962
      %v1985 = vunpack.c.h.b16 %v1962
      %v1986 = vunpack.c.l.b16 %v1963
      %v1987 = vunpack.c.h.b16 %v1963
      %v1988 = vpack.c.b16 %v1972, %v1972
      %v1989 = vpack.c.b16 %v1973, %v1973
      %v1990 = vpack.c.b16 %v1974, %v1974
      %v1991 = vpack.c.b16 %v1975, %v1975
      %v1992 = vpack.c.b16 %v1976, %v1976
      %v1993 = vpack.c.b16 %v1977, %v1977
      %v1994 = vpack.c.b16 %v1978, %v1978
      %v1995 = vpack.c.b16 %v1979, %v1979
      %v1996 = vpack.c.b16 %v1980, %v1980
      %v1997 = vpack.c.b16 %v1981, %v1981
      %v1998 = vpack.c.b16 %v1982, %v1982
      %v1999 = vpack.c.b16 %v1983, %v1983
      %v2000 = vpack.c.b16 %v1984, %v1984
      %v2001 = vpack.c.b16 %v1985, %v1985
      %v2002 = vpack.c.b16 %v1986, %v1986
      %v2003 = vpack.c.b16 %v1987, %v1987
      %2020 = vst [vmem:[%s200] sm:$0xf] %v1988
      %2021 = vst [vmem:[%s200 + $0x4] sm:$0xf] %v1989
      %2022 = vst [vmem:[%s200 + $0x8] sm:$0xf] %v1990
      %2023 = vst [vmem:[%s200 + $0xc] sm:$0xf] %v1991
      %2024 = vst [vmem:[%s200 + $0x10] sm:$0xf] %v1992
      %2025 = vst [vmem:[%s200 + $0x14] sm:$0xf] %v1993
      %2026 = vst [vmem:[%s200 + $0x18] sm:$0xf] %v1994
      %2027 = vst [vmem:[%s200 + $0x1c] sm:$0xf] %v1995
      %2028 = vst [vmem:[%s200 + $0x20] sm:$0xf] %v1996
      %2029 = vst [vmem:[%s200 + $0x24] sm:$0xf] %v1997
      %2030 = vst [vmem:[%s200 + $0x28] sm:$0xf] %v1998
      %2031 = vst [vmem:[%s200 + $0x2c] sm:$0xf] %v1999
      %2032 = vst [vmem:[%s200 + $0x30] sm:$0xf] %v2000
      %2033 = vst [vmem:[%s200 + $0x34] sm:$0xf] %v2001
      %2034 = vst [vmem:[%s200 + $0x38] sm:$0xf] %v2002
      %2035 = vst [vmem:[%s200 + $0x3c] sm:$0xf] %v2003
      %s2036 = smul.u32 16, %s16
      %p2037 = scmp.lt.s32.totalorder %s2036, 47
      %s2038 = scalar_select %p2037, %s2036, 47
      %s2039 = smul.addr %s2038, 4
      %s2040 = scalar_lea.vmem %s4, %s2039
      // Predicated region
      $region37: #{graph_convolution.2} parent=35 // pred_check
        %p2041 = pneg %p123
      $region38: #{graph_convolution.2} parent=35 // pred_check_branch
        %2043 = sbr.rel (%p2041) target = $region40
      $region39: #{graph_convolution.2} parent=35 // pred_region
        %s2044 = smul.u32 16, %s16
      $region40: #{graph_convolution.2} parent=35 // pred_fallthru
        _
    $region36: #{graph_convolution.2} parent=5 // pred_fallthru
      _
    %p2045 = scmp.le.s32.totalorder 2, %s11
    // Predicated region
    $region41: #{graph_convolution.2} parent=5 // pred_check
      %p2046 = pneg %p2045
    $region42: #{graph_convolution.2} parent=5 // pred_check_branch
      %2048 = sbr.rel (%p2046) target = $region44
    $region43: #{graph_convolution.2} parent=5 // pred_region
      %s2049 = ssub.s32 %s11, 2
      // Predicated region
      $region45: #{graph_convolution.2} parent=43 // pred_check
        %p2050 = pneg %p129
      $region46: #{graph_convolution.2} parent=43 // pred_check_branch
        %2052 = sbr.rel (%p2050) target = $region48
      $region47: #{graph_convolution.2} parent=43 // pred_region
        %s2053 = smul.u32 16, %s17
        %p2054 = scmp.lt.s32.totalorder %s2053, 47
        %s2055 = scalar_select %p2054, %s2053, 47
        %s2056 = smul.addr %s2055, 4
        %s2057 = scalar_lea.vmem %s4, %s2056
      $region48: #{graph_convolution.2} parent=43 // pred_fallthru
        _
    $region44: #{graph_convolution.2} parent=5 // pred_fallthru
      _
  $region6: #{graph_convolution.2} parent=0 // loop_footer
    %s15 = sadd.s32 1, %s11
  $region7: #{graph_convolution.2} parent=0 // loop_footer_branch
    %10 = sbr.rel target = $region3
  $region8: #{graph_convolution.2} parent=0 // loop_exit
    _

</llo_original>
